<compile_context>
chip_gen: v7x
topology: tpu7x:2x2x1
jax: 0.10.0
libtpu: 0.0.40
codegen_flags: <defaults>
</compile_context>

<pallas_src>
import math

import jax
import jax.numpy as jnp
from jax import lax
from jax.experimental import pallas as pl
from jax.experimental.pallas import tpu as pltpu


def _pick_batch_tile(B, C, HW, budget_bytes=4 << 20, min_grid=2):
    """Largest batch tile that divides B, fits the f32 block budget, and keeps
    the grid >= min_grid steps when possible (v7x has 2 TensorCores)."""
    best = 1
    for bt in range(1, B + 1):
        if B % bt:
            continue
        if bt * C * HW * 4 > budget_bytes:
            continue
        if B >= min_grid and (B // bt) < min_grid:
            continue
        best = bt
    return best


def ghost_cbam_bottleneck(x, p):
    B, C, H, W = x.shape
    Cinit = int(p["s1"].shape[0])
    Cnew = int(p["s2"].shape[0])
    Cm = int(p["w0a"].shape[1])
    # Ghost module with ratio=2 and oup == inp (needed by `out + attn` and the
    # residual `+ x`).
    # TODO(synk): odd C (Cinit + Cnew > C, sliced to oup) is not handled.
    assert Cinit == Cnew and Cinit + Cnew == C
    HW = H * W
    Bt = _pick_batch_tile(B, C, HW)
    grid = (B // Bt,)
    taps = [(du, dv) for du in (-1, 0, 1) for dv in (-1, 0, 1)]  # k=(du+1)*3+(dv+1)

    def kernel(x_ref, mask_ref, ca_wa_ref, ca_ba_ref, ca_wb_ref, ca_bsum_ref,
               wp_ref, wdw_ref, bn_ref, sp_ref, o_ref):
        xv = x_ref[...]                                       # (Bt, C, HW) f32

        # ---- ChannelAttention: global avg / max pool (lane reductions) ------
        avg = jnp.mean(xv, axis=2, keepdims=True)             # (Bt, C, 1)
        mx = jnp.max(xv, axis=2, keepdims=True)               # (Bt, C, 1)

        def ca_mlp(pool, g):
            # Linear(C->Cm) + ReLU + Linear(Cm->C), batched over Bt as two
            # channel contractions.  TODO(synk): jnp.dot / MXU for C >= 32.
            h = jnp.sum(pool * ca_wa_ref[g][None], axis=1, keepdims=True)
            h = jnp.maximum(h + ca_ba_ref[g][None], 0.0)      # (Bt, 1, Cm)
            return jnp.sum(h * ca_wb_ref[g][None], axis=2, keepdims=True)  # (Bt, C, 1)

        sig = jax.nn.sigmoid(ca_mlp(avg, 0) + ca_mlp(mx, 1) + ca_bsum_ref[...])
        fp = xv * sig                                         # chan_att * x

        # ---- 3x3 'same' shift: b[..., p] = a[..., p + du*W + dv], 0-padded --
        # Static lane rotation (slice + concat) * precomputed boundary mask.
        def shift(a, du, dv, k):
            s = du * W + dv
            if s == 0:
                return a
            i = s % HW
            rolled = jnp.concatenate([a[:, :, i:], a[:, :, :i]], axis=2)
            return rolled * mask_ref[k]

        # ---- SpatialAttention: channel max/mean + 3x3 conv (2 -> 1) ---------
        maxc = jnp.max(fp, axis=1, keepdims=True)             # (Bt, 1, HW)
        avgc = jnp.mean(fp, axis=1, keepdims=True)            # (Bt, 1, HW)
        conv = jnp.zeros_like(maxc)
        for k, (du, dv) in enumerate(taps):
            # shifting is linear -> combine both conv channels first (1 shift/tap)
            conv = conv + shift(maxc * sp_ref[k] + avgc * sp_ref[9 + k], du, dv, k)
        spat = jax.nn.sigmoid(conv + sp_ref[18])              # (Bt, 1, HW)
        fpp = spat * fp                                       # CBAM output

        # ---- Ghost primary_conv: 1x1 conv (contraction over C) + BN + ReLU --
        pre = xv[:, 0:1, :] * wp_ref[0]                       # (Bt, Cinit, HW)
        for c in range(1, C):
            pre = pre + xv[:, c:c + 1, :] * wp_ref[c]
        x1 = jnp.maximum(pre * bn_ref[0] + bn_ref[1], 0.0)    # (Bt, Cinit, HW)

        # ---- Ghost cheap_operation: depthwise 3x3 + BN + ReLU ---------------
        acc = jnp.zeros((Bt, Cnew, HW), jnp.float32)
        for k, (du, dv) in enumerate(taps):
            acc = acc + shift(x1, du, dv, k) * wdw_ref[k]
        x2 = jnp.maximum(acc * bn_ref[2] + bn_ref[3], 0.0)    # (Bt, Cnew, HW)

        # ---- cat([x1, x2], channel) + spatial*channel attention + residual --
        ghost = jnp.concatenate([x1, x2], axis=1)             # (Bt, C, HW)
        o_ref[...] = ghost + fpp + xv                         # full lane-dense store

    # ---- wrapper-side layout plumbing ---------------------------------------
    xf = x.reshape(B, C, HW).astype(jnp.float32)

    # Nine 3x3 boundary masks, precomputed once and packed into one array.
    pos = jnp.arange(HW, dtype=jnp.int32)
    rows, cols = pos // W, pos % W
    masks = jnp.stack([
        ((rows + du >= 0) & (rows + du < H) & (cols + dv >= 0) & (cols + dv < W))
        for du, dv in taps]).astype(jnp.float32).reshape(9, 1, HW)

    # Packed weights (NOT pre-tiled by Bt; broadcast inside the kernel).
    ca_wa = jnp.stack([p["w0a"], p["w1a"]])                    # (2, C, Cm)
    ca_ba = jnp.stack([p["b0a"], p["b1a"]])                    # (2, 1, Cm)
    ca_wb = jnp.stack([p["w0b"], p["w1b"]])                    # (2, C, Cm)
    ca_bsum = (p["b0b"] + p["b1b"]).reshape(1, C, 1)           # (1, C, 1)
    wp = jnp.transpose(p["wp_full"]).reshape(C, Cinit, 1)      # wp[c, o, 0] = W[o, c]
    wdw = jnp.transpose(p["wdw_full"].reshape(Cnew, 9)).reshape(9, Cnew, 1)
    bn = jnp.stack([p["s1"], p["t1"], p["s2"], p["t2"]]).reshape(4, Cinit, 1)
    sp = jnp.concatenate([p["spw_full"].reshape(-1), p["spb"]])  # (19,) SMEM scalars

    in_specs = [pl.BlockSpec((Bt, C, HW), lambda i: (i, 0, 0))]
    in_specs += [pl.BlockSpec(memory_space=pltpu.MemorySpace.VMEM)] * 8
    in_specs += [pl.BlockSpec(memory_space=pltpu.MemorySpace.SMEM)]

    block_bytes = Bt * C * HW * 4
    weight_bytes = 4 * sum(int(a.size) for a in
                           (masks, ca_wa, ca_ba, ca_wb, ca_bsum, wp, wdw, bn))
    vmem_limit = int(min(48 << 20,
                         max(32 << 20, 6 * block_bytes + 2 * weight_bytes + (4 << 20))))

    cost = pl.CostEstimate(
        flops=int(B * HW * (2 * C * Cinit + 18 * Cnew + 36 + 8 * C) + B * 8 * C * Cm),
        transcendentals=int(B * (HW + C)),
        bytes_accessed=int(2 * B * C * HW * 4 + weight_bytes + 19 * 4),
    )

    out = pl.pallas_call(
        kernel,
        out_shape=jax.ShapeDtypeStruct((B, C, HW), jnp.float32),
        grid=grid,
        in_specs=in_specs,
        out_specs=pl.BlockSpec((Bt, C, HW), lambda i: (i, 0, 0)),
        compiler_params=pltpu.CompilerParams(
            dimension_semantics=("parallel",),
            vmem_limit_bytes=vmem_limit),
        cost_estimate=cost,
    )(xf, masks, ca_wa, ca_ba, ca_wb, ca_bsum, wp, wdw, bn, sp)
    return out.reshape(B, C, H, W)


# ------------------------------------------------------------------------------
# Deterministic parameter construction (synthetic weights)
# ------------------------------------------------------------------------------
def init_params(key, C):
    Cm = int(C / 2.0)                 # ChannelAttention reduction_ratio = 2
    Cinit = math.ceil(C / 2)          # Ghost ratio = 2
    Cnew = Cinit                      # init_channels * (ratio - 1)
    ks = jax.random.split(key, 20)
    n = lambda k, s, sc=0.2: sc * jax.random.normal(k, s, dtype=jnp.float32)

    p = {}
    # Channel-attention bottleneck MLPs (Linear C->Cm, ReLU, Linear Cm->C)
    p["w0a"], p["b0a"] = n(ks[0], (C, Cm)), n(ks[1], (1, Cm), 0.1)
    p["w0b"], p["b0b"] = n(ks[2], (C, Cm)), n(ks[3], (C, 1), 0.1)
    p["w1a"], p["b1a"] = n(ks[4], (C, Cm)), n(ks[5], (1, Cm), 0.1)
    p["w1b"], p["b1b"] = n(ks[6], (C, Cm)), n(ks[7], (C, 1), 0.1)
    # Spatial attention conv: 2 -> 1 channels, 3x3, with bias
    p["spw_full"] = n(ks[8], (2, 3, 3))
    p["spb"] = n(ks[9], (1,), 0.1)
    # Ghost primary 1x1 conv (no bias) and depthwise 3x3 conv (no bias)
    p["wp_full"] = n(ks[10], (Cinit, C), 0.3)
    p["wdw_full"] = n(ks[11], (Cnew, 3, 3), 0.3)
    # BatchNorms (inference mode), folded into per-channel scale/shift
    eps = 1e-5
    g1, bbn1 = 1.0 + n(ks[12], (Cinit,), 0.1), n(ks[13], (Cinit,), 0.1)
    m1, v1 = n(ks[14], (Cinit,), 0.1), 1.0 + jnp.abs(n(ks[15], (Cinit,), 0.1))
    p["s1"] = g1 / jnp.sqrt(v1 + eps)
    p["t1"] = bbn1 - m1 * p["s1"]
    g2, bbn2 = 1.0 + n(ks[16], (Cnew,), 0.1), n(ks[17], (Cnew,), 0.1)
    m2, v2 = n(ks[18], (Cnew,), 0.1), 1.0 + jnp.abs(n(ks[19], (Cnew,), 0.1))
    p["s2"] = g2 / jnp.sqrt(v2 + eps)
    p["t2"] = bbn2 - m2 * p["s2"]
    return p


# ------------------------------------------------------------------------------
# Pure-JAX reference (same math, vectorized) for verification
# ------------------------------------------------------------------------------
def reference(x, p):
    B, C, H, W = x.shape
    avg, mx = x.mean(axis=(2, 3)), x.max(axis=(2, 3))

    def mlp(v, wa, ba, wb, bb):
        h = jnp.maximum(v @ wa + ba, 0.0)
        return h @ wb.T + bb[:, 0][None, :]

    sig = jax.nn.sigmoid(mlp(avg, p["w0a"], p["b0a"], p["w0b"], p["b0b"]) +
                         mlp(mx, p["w1a"], p["b1a"], p["w1b"], p["b1b"]))
    fp = x * sig[:, :, None, None]
    pool = jnp.stack([fp.max(axis=1), fp.mean(axis=1)], axis=1)
    dn = ("NCHW", "OIHW", "NCHW")
    conv = lax.conv_general_dilated(pool, p["spw_full"][None], (1, 1), "SAME",
                                    dimension_numbers=dn) + p["spb"][0]
    attn = jax.nn.sigmoid(conv) * fp
    x1 = jnp.einsum("bchw,oc->bohw", x, p["wp_full"])
    x1 = jnp.maximum(x1 * p["s1"][None, :, None, None] + p["t1"][None, :, None, None], 0.0)
    Cinit = p["s1"].shape[0]
    x2 = lax.conv_general_dilated(x1, p["wdw_full"][:, None], (1, 1), "SAME",
                                  dimension_numbers=dn, feature_group_count=Cinit)
    x2 = jnp.maximum(x2 * p["s2"][None, :, None, None] + p["t2"][None, :, None, None], 0.0)
    out = jnp.concatenate([x1, x2], axis=1) + attn
    return out[:, :C] + x


if __name__ == "__main__":
    B, C, H, W = 2, 4, 16, 16          # inp == out == 4
    key = jax.random.PRNGKey(0)
    kx, kp = jax.random.split(key)
    x = jax.random.normal(kx, (B, C, H, W), dtype=jnp.float32)
    params = init_params(kp, C)

    out = jax.block_until_ready(ghost_cbam_bottleneck(x, params))

    ref = reference(x, params)
    err = float(jnp.max(jnp.abs(out - ref)))
    assert out.shape == (B, C, H, W)
    if err > 1e-3:
        raise AssertionError(f"Pallas kernel mismatch vs reference: max abs err = {err}")
    print("KERNEL_OK")
</pallas_src>

<mosaic_0001>
module attributes {stable_mosaic.version = 11 : i64} {
  func.func @kernel(%arg0: i32, %arg1: memref<1x4x256xf32, #tpu.memory_space<vmem>>, %arg2: memref<9x1x256xf32, #tpu.memory_space<vmem>>, %arg3: memref<2x4x2xf32, #tpu.memory_space<vmem>>, %arg4: memref<2x1x2xf32, #tpu.memory_space<vmem>>, %arg5: memref<2x4x2xf32, #tpu.memory_space<vmem>>, %arg6: memref<1x4x1xf32, #tpu.memory_space<vmem>>, %arg7: memref<4x2x1xf32, #tpu.memory_space<vmem>>, %arg8: memref<9x2x1xf32, #tpu.memory_space<vmem>>, %arg9: memref<4x2x1xf32, #tpu.memory_space<vmem>>, %arg10: memref<19xf32, #tpu.memory_space<smem>>, %arg11: memref<1x4x256xf32, #tpu.memory_space<vmem>>) attributes {dimension_semantics = [#tpu.dimension_semantics<parallel>], iteration_bounds = array<i64: 2>, scalar_prefetch = 0 : i64, scratch_operands = 0 : i64, tpu.core_type = #tpu.core_type<tc>, window_params = [{transform_indices = @transform_0, window_bounds = array<i64: 1, 4, 256>}, {pipeline_mode = #tpu.pipeline_mode<synchronous>, transform_indices = @transform_1, window_bounds = array<i64: 9, 1, 256>}, {pipeline_mode = #tpu.pipeline_mode<synchronous>, transform_indices = @transform_2, window_bounds = array<i64: 2, 4, 2>}, {pipeline_mode = #tpu.pipeline_mode<synchronous>, transform_indices = @transform_3, window_bounds = array<i64: 2, 1, 2>}, {pipeline_mode = #tpu.pipeline_mode<synchronous>, transform_indices = @transform_4, window_bounds = array<i64: 2, 4, 2>}, {pipeline_mode = #tpu.pipeline_mode<synchronous>, transform_indices = @transform_5, window_bounds = array<i64: 1, 4, 1>}, {pipeline_mode = #tpu.pipeline_mode<synchronous>, transform_indices = @transform_6, window_bounds = array<i64: 4, 2, 1>}, {pipeline_mode = #tpu.pipeline_mode<synchronous>, transform_indices = @transform_7, window_bounds = array<i64: 9, 2, 1>}, {pipeline_mode = #tpu.pipeline_mode<synchronous>, transform_indices = @transform_8, window_bounds = array<i64: 4, 2, 1>}, {transform_indices = @transform_9, window_bounds = array<i64: 19>}, {transform_indices = @transform_10, window_bounds = array<i64: 1, 4, 256>}]} {
    %c0 = arith.constant 0 : index
    %c0_0 = arith.constant 0 : index
    %c0_1 = arith.constant 0 : index
    %0 = vector.load %arg1[%c0, %c0_0, %c0_1] : memref<1x4x256xf32, #tpu.memory_space<vmem>>, vector<1x4x256xf32>
    %cst = arith.constant dense<0.000000e+00> : vector<1x4xf32>
    %1 = vector.multi_reduction <add>, %0, %cst [2] : vector<1x4x256xf32> to vector<1x4xf32>
    %2 = vector.shape_cast %1 : vector<1x4xf32> to vector<1x4x1xf32>
    %cst_2 = arith.constant 2.560000e+02 : f32
    %3 = vector.broadcast %cst_2 : f32 to vector<1x4x1xf32>
    %4 = arith.divf %2, %3 : vector<1x4x1xf32>
    %cst_3 = arith.constant dense<0xFF800000> : vector<1x4xf32>
    %5 = vector.multi_reduction <maximumf>, %0, %cst_3 [2] : vector<1x4x256xf32> to vector<1x4xf32>
    %6 = vector.shape_cast %5 : vector<1x4xf32> to vector<1x4x1xf32>
    %c0_4 = arith.constant 0 : index
    %c0_5 = arith.constant 0 : index
    %c0_6 = arith.constant 0 : index
    %7 = vector.load %arg3[%c0_4, %c0_5, %c0_6] : memref<2x4x2xf32, #tpu.memory_space<vmem>>, vector<1x4x2xf32>
    %8 = vector.shape_cast %7 : vector<1x4x2xf32> to vector<4x2xf32>
    %9 = vector.shape_cast %8 : vector<4x2xf32> to vector<1x4x2xf32>
    %10 = vector.broadcast %4 : vector<1x4x1xf32> to vector<1x4x2xf32>
    %11 = arith.mulf %10, %9 : vector<1x4x2xf32>
    %cst_7 = arith.constant dense<0.000000e+00> : vector<1x2xf32>
    %12 = vector.multi_reduction <add>, %11, %cst_7 [1] : vector<1x4x2xf32> to vector<1x2xf32>
    %13 = vector.shape_cast %12 : vector<1x2xf32> to vector<1x1x2xf32>
    %c0_8 = arith.constant 0 : index
    %c0_9 = arith.constant 0 : index
    %c0_10 = arith.constant 0 : index
    %14 = vector.load %arg4[%c0_8, %c0_9, %c0_10] : memref<2x1x2xf32, #tpu.memory_space<vmem>>, vector<1x1x2xf32>
    %15 = vector.shape_cast %14 : vector<1x1x2xf32> to vector<1x2xf32>
    %16 = vector.shape_cast %15 : vector<1x2xf32> to vector<1x1x2xf32>
    %17 = arith.addf %13, %16 : vector<1x1x2xf32>
    %cst_11 = arith.constant 0.000000e+00 : f32
    %18 = vector.broadcast %cst_11 : f32 to vector<1x1x2xf32>
    %19 = arith.maximumf %17, %18 : vector<1x1x2xf32>
    %c0_12 = arith.constant 0 : index
    %c0_13 = arith.constant 0 : index
    %c0_14 = arith.constant 0 : index
    %20 = vector.load %arg5[%c0_12, %c0_13, %c0_14] : memref<2x4x2xf32, #tpu.memory_space<vmem>>, vector<1x4x2xf32>
    %21 = vector.shape_cast %20 : vector<1x4x2xf32> to vector<4x2xf32>
    %22 = vector.shape_cast %21 : vector<4x2xf32> to vector<1x4x2xf32>
    %23 = vector.broadcast %19 : vector<1x1x2xf32> to vector<1x4x2xf32>
    %24 = arith.mulf %23, %22 : vector<1x4x2xf32>
    %cst_15 = arith.constant dense<0.000000e+00> : vector<1x4xf32>
    %25 = vector.multi_reduction <add>, %24, %cst_15 [2] : vector<1x4x2xf32> to vector<1x4xf32>
    %26 = vector.shape_cast %25 : vector<1x4xf32> to vector<1x4x1xf32>
    %c1 = arith.constant 1 : index
    %c0_16 = arith.constant 0 : index
    %c0_17 = arith.constant 0 : index
    %27 = vector.load %arg3[%c1, %c0_16, %c0_17] : memref<2x4x2xf32, #tpu.memory_space<vmem>>, vector<1x4x2xf32>
    %28 = vector.shape_cast %27 : vector<1x4x2xf32> to vector<4x2xf32>
    %29 = vector.shape_cast %28 : vector<4x2xf32> to vector<1x4x2xf32>
    %30 = vector.broadcast %6 : vector<1x4x1xf32> to vector<1x4x2xf32>
    %31 = arith.mulf %30, %29 : vector<1x4x2xf32>
    %cst_18 = arith.constant dense<0.000000e+00> : vector<1x2xf32>
    %32 = vector.multi_reduction <add>, %31, %cst_18 [1] : vector<1x4x2xf32> to vector<1x2xf32>
    %33 = vector.shape_cast %32 : vector<1x2xf32> to vector<1x1x2xf32>
    %c1_19 = arith.constant 1 : index
    %c0_20 = arith.constant 0 : index
    %c0_21 = arith.constant 0 : index
    %34 = vector.load %arg4[%c1_19, %c0_20, %c0_21] : memref<2x1x2xf32, #tpu.memory_space<vmem>>, vector<1x1x2xf32>
    %35 = vector.shape_cast %34 : vector<1x1x2xf32> to vector<1x2xf32>
    %36 = vector.shape_cast %35 : vector<1x2xf32> to vector<1x1x2xf32>
    %37 = arith.addf %33, %36 : vector<1x1x2xf32>
    %cst_22 = arith.constant 0.000000e+00 : f32
    %38 = vector.broadcast %cst_22 : f32 to vector<1x1x2xf32>
    %39 = arith.maximumf %37, %38 : vector<1x1x2xf32>
    %c1_23 = arith.constant 1 : index
    %c0_24 = arith.constant 0 : index
    %c0_25 = arith.constant 0 : index
    %40 = vector.load %arg5[%c1_23, %c0_24, %c0_25] : memref<2x4x2xf32, #tpu.memory_space<vmem>>, vector<1x4x2xf32>
    %41 = vector.shape_cast %40 : vector<1x4x2xf32> to vector<4x2xf32>
    %42 = vector.shape_cast %41 : vector<4x2xf32> to vector<1x4x2xf32>
    %43 = vector.broadcast %39 : vector<1x1x2xf32> to vector<1x4x2xf32>
    %44 = arith.mulf %43, %42 : vector<1x4x2xf32>
    %cst_26 = arith.constant dense<0.000000e+00> : vector<1x4xf32>
    %45 = vector.multi_reduction <add>, %44, %cst_26 [2] : vector<1x4x2xf32> to vector<1x4xf32>
    %46 = vector.shape_cast %45 : vector<1x4xf32> to vector<1x4x1xf32>
    %47 = arith.addf %26, %46 : vector<1x4x1xf32>
    %c0_27 = arith.constant 0 : index
    %c0_28 = arith.constant 0 : index
    %c0_29 = arith.constant 0 : index
    %48 = vector.load %arg6[%c0_27, %c0_28, %c0_29] : memref<1x4x1xf32, #tpu.memory_space<vmem>>, vector<1x4x1xf32>
    %49 = arith.addf %47, %48 : vector<1x4x1xf32>
    %50 = arith.negf %49 : vector<1x4x1xf32>
    %51 = math.exp %50 : vector<1x4x1xf32>
    %cst_30 = arith.constant 1.000000e+00 : f32
    %52 = vector.broadcast %cst_30 : f32 to vector<1x4x1xf32>
    %53 = arith.addf %52, %51 : vector<1x4x1xf32>
    %54 = arith.divf %52, %53 : vector<1x4x1xf32>
    %55 = vector.broadcast %54 : vector<1x4x1xf32> to vector<1x4x256xf32>
    %56 = arith.mulf %0, %55 : vector<1x4x256xf32>
    %cst_31 = arith.constant dense<0xFF800000> : vector<1x256xf32>
    %57 = vector.multi_reduction <maximumf>, %56, %cst_31 [1] : vector<1x4x256xf32> to vector<1x256xf32>
    %58 = vector.shape_cast %57 : vector<1x256xf32> to vector<1x1x256xf32>
    %cst_32 = arith.constant dense<0.000000e+00> : vector<1x256xf32>
    %59 = vector.multi_reduction <add>, %56, %cst_32 [1] : vector<1x4x256xf32> to vector<1x256xf32>
    %60 = vector.shape_cast %59 : vector<1x256xf32> to vector<1x1x256xf32>
    %cst_33 = arith.constant 4.000000e+00 : f32
    %61 = vector.broadcast %cst_33 : f32 to vector<1x1x256xf32>
    %62 = arith.divf %60, %61 : vector<1x1x256xf32>
    %cst_34 = arith.constant 0.000000e+00 : f32
    %63 = vector.broadcast %cst_34 : f32 to vector<1x1x256xf32>
    %c0_35 = arith.constant 0 : index
    %64 = memref.load %arg10[%c0_35] : memref<19xf32, #tpu.memory_space<smem>>
    %65 = vector.broadcast %64 : f32 to vector<1x1x256xf32>
    %66 = arith.mulf %58, %65 : vector<1x1x256xf32>
    %c9 = arith.constant 9 : index
    %67 = memref.load %arg10[%c9] : memref<19xf32, #tpu.memory_space<smem>>
    %68 = vector.broadcast %67 : f32 to vector<1x1x256xf32>
    %69 = arith.mulf %62, %68 : vector<1x1x256xf32>
    %70 = arith.addf %66, %69 : vector<1x1x256xf32>
    %71 = vector.extract_strided_slice %70 {offsets = [0, 0, 239], sizes = [1, 1, 17], strides = [1, 1, 1]} : vector<1x1x256xf32> to vector<1x1x17xf32>
    %72 = vector.extract_strided_slice %70 {offsets = [0, 0, 0], sizes = [1, 1, 239], strides = [1, 1, 1]} : vector<1x1x256xf32> to vector<1x1x239xf32>
    %73 = tpu.concatenate %71, %72 in 2 : vector<1x1x17xf32>, vector<1x1x239xf32> -> vector<1x1x256xf32>
    %c0_36 = arith.constant 0 : index
    %c0_37 = arith.constant 0 : index
    %c0_38 = arith.constant 0 : index
    %74 = vector.load %arg2[%c0_36, %c0_37, %c0_38] : memref<9x1x256xf32, #tpu.memory_space<vmem>>, vector<1x1x256xf32>
    %75 = vector.shape_cast %74 : vector<1x1x256xf32> to vector<1x256xf32>
    %76 = vector.shape_cast %75 : vector<1x256xf32> to vector<1x1x256xf32>
    %77 = arith.mulf %73, %76 : vector<1x1x256xf32>
    %78 = arith.addf %63, %77 : vector<1x1x256xf32>
    %c1_39 = arith.constant 1 : index
    %79 = memref.load %arg10[%c1_39] : memref<19xf32, #tpu.memory_space<smem>>
    %80 = vector.broadcast %79 : f32 to vector<1x1x256xf32>
    %81 = arith.mulf %58, %80 : vector<1x1x256xf32>
    %c10 = arith.constant 10 : index
    %82 = memref.load %arg10[%c10] : memref<19xf32, #tpu.memory_space<smem>>
    %83 = vector.broadcast %82 : f32 to vector<1x1x256xf32>
    %84 = arith.mulf %62, %83 : vector<1x1x256xf32>
    %85 = arith.addf %81, %84 : vector<1x1x256xf32>
    %86 = vector.extract_strided_slice %85 {offsets = [0, 0, 240], sizes = [1, 1, 16], strides = [1, 1, 1]} : vector<1x1x256xf32> to vector<1x1x16xf32>
    %87 = vector.extract_strided_slice %85 {offsets = [0, 0, 0], sizes = [1, 1, 240], strides = [1, 1, 1]} : vector<1x1x256xf32> to vector<1x1x240xf32>
    %88 = tpu.concatenate %86, %87 in 2 : vector<1x1x16xf32>, vector<1x1x240xf32> -> vector<1x1x256xf32>
    %c1_40 = arith.constant 1 : index
    %c0_41 = arith.constant 0 : index
    %c0_42 = arith.constant 0 : index
    %89 = vector.load %arg2[%c1_40, %c0_41, %c0_42] : memref<9x1x256xf32, #tpu.memory_space<vmem>>, vector<1x1x256xf32>
    %90 = vector.shape_cast %89 : vector<1x1x256xf32> to vector<1x256xf32>
    %91 = vector.shape_cast %90 : vector<1x256xf32> to vector<1x1x256xf32>
    %92 = arith.mulf %88, %91 : vector<1x1x256xf32>
    %93 = arith.addf %78, %92 : vector<1x1x256xf32>
    %c2 = arith.constant 2 : index
    %94 = memref.load %arg10[%c2] : memref<19xf32, #tpu.memory_space<smem>>
    %95 = vector.broadcast %94 : f32 to vector<1x1x256xf32>
    %96 = arith.mulf %58, %95 : vector<1x1x256xf32>
    %c11 = arith.constant 11 : index
    %97 = memref.load %arg10[%c11] : memref<19xf32, #tpu.memory_space<smem>>
    %98 = vector.broadcast %97 : f32 to vector<1x1x256xf32>
    %99 = arith.mulf %62, %98 : vector<1x1x256xf32>
    %100 = arith.addf %96, %99 : vector<1x1x256xf32>
    %101 = vector.extract_strided_slice %100 {offsets = [0, 0, 241], sizes = [1, 1, 15], strides = [1, 1, 1]} : vector<1x1x256xf32> to vector<1x1x15xf32>
    %102 = vector.extract_strided_slice %100 {offsets = [0, 0, 0], sizes = [1, 1, 241], strides = [1, 1, 1]} : vector<1x1x256xf32> to vector<1x1x241xf32>
    %103 = tpu.concatenate %101, %102 in 2 : vector<1x1x15xf32>, vector<1x1x241xf32> -> vector<1x1x256xf32>
    %c2_43 = arith.constant 2 : index
    %c0_44 = arith.constant 0 : index
    %c0_45 = arith.constant 0 : index
    %104 = vector.load %arg2[%c2_43, %c0_44, %c0_45] : memref<9x1x256xf32, #tpu.memory_space<vmem>>, vector<1x1x256xf32>
    %105 = vector.shape_cast %104 : vector<1x1x256xf32> to vector<1x256xf32>
    %106 = vector.shape_cast %105 : vector<1x256xf32> to vector<1x1x256xf32>
    %107 = arith.mulf %103, %106 : vector<1x1x256xf32>
    %108 = arith.addf %93, %107 : vector<1x1x256xf32>
    %c3 = arith.constant 3 : index
    %109 = memref.load %arg10[%c3] : memref<19xf32, #tpu.memory_space<smem>>
    %110 = vector.broadcast %109 : f32 to vector<1x1x256xf32>
    %111 = arith.mulf %58, %110 : vector<1x1x256xf32>
    %c12 = arith.constant 12 : index
    %112 = memref.load %arg10[%c12] : memref<19xf32, #tpu.memory_space<smem>>
    %113 = vector.broadcast %112 : f32 to vector<1x1x256xf32>
    %114 = arith.mulf %62, %113 : vector<1x1x256xf32>
    %115 = arith.addf %111, %114 : vector<1x1x256xf32>
    %116 = vector.extract_strided_slice %115 {offsets = [0, 0, 255], sizes = [1, 1, 1], strides = [1, 1, 1]} : vector<1x1x256xf32> to vector<1x1x1xf32>
    %117 = vector.extract_strided_slice %115 {offsets = [0, 0, 0], sizes = [1, 1, 255], strides = [1, 1, 1]} : vector<1x1x256xf32> to vector<1x1x255xf32>
    %118 = tpu.concatenate %116, %117 in 2 : vector<1x1x1xf32>, vector<1x1x255xf32> -> vector<1x1x256xf32>
    %c3_46 = arith.constant 3 : index
    %c0_47 = arith.constant 0 : index
    %c0_48 = arith.constant 0 : index
    %119 = vector.load %arg2[%c3_46, %c0_47, %c0_48] : memref<9x1x256xf32, #tpu.memory_space<vmem>>, vector<1x1x256xf32>
    %120 = vector.shape_cast %119 : vector<1x1x256xf32> to vector<1x256xf32>
    %121 = vector.shape_cast %120 : vector<1x256xf32> to vector<1x1x256xf32>
    %122 = arith.mulf %118, %121 : vector<1x1x256xf32>
    %123 = arith.addf %108, %122 : vector<1x1x256xf32>
    %c4 = arith.constant 4 : index
    %124 = memref.load %arg10[%c4] : memref<19xf32, #tpu.memory_space<smem>>
    %125 = vector.broadcast %124 : f32 to vector<1x1x256xf32>
    %126 = arith.mulf %58, %125 : vector<1x1x256xf32>
    %c13 = arith.constant 13 : index
    %127 = memref.load %arg10[%c13] : memref<19xf32, #tpu.memory_space<smem>>
    %128 = vector.broadcast %127 : f32 to vector<1x1x256xf32>
    %129 = arith.mulf %62, %128 : vector<1x1x256xf32>
    %130 = arith.addf %126, %129 : vector<1x1x256xf32>
    %131 = arith.addf %123, %130 : vector<1x1x256xf32>
    %c5 = arith.constant 5 : index
    %132 = memref.load %arg10[%c5] : memref<19xf32, #tpu.memory_space<smem>>
    %133 = vector.broadcast %132 : f32 to vector<1x1x256xf32>
    %134 = arith.mulf %58, %133 : vector<1x1x256xf32>
    %c14 = arith.constant 14 : index
    %135 = memref.load %arg10[%c14] : memref<19xf32, #tpu.memory_space<smem>>
    %136 = vector.broadcast %135 : f32 to vector<1x1x256xf32>
    %137 = arith.mulf %62, %136 : vector<1x1x256xf32>
    %138 = arith.addf %134, %137 : vector<1x1x256xf32>
    %139 = vector.extract_strided_slice %138 {offsets = [0, 0, 1], sizes = [1, 1, 255], strides = [1, 1, 1]} : vector<1x1x256xf32> to vector<1x1x255xf32>
    %140 = vector.extract_strided_slice %138 {offsets = [0, 0, 0], sizes = [1, 1, 1], strides = [1, 1, 1]} : vector<1x1x256xf32> to vector<1x1x1xf32>
    %141 = tpu.concatenate %139, %140 in 2 : vector<1x1x255xf32>, vector<1x1x1xf32> -> vector<1x1x256xf32>
    %c5_49 = arith.constant 5 : index
    %c0_50 = arith.constant 0 : index
    %c0_51 = arith.constant 0 : index
    %142 = vector.load %arg2[%c5_49, %c0_50, %c0_51] : memref<9x1x256xf32, #tpu.memory_space<vmem>>, vector<1x1x256xf32>
    %143 = vector.shape_cast %142 : vector<1x1x256xf32> to vector<1x256xf32>
    %144 = vector.shape_cast %143 : vector<1x256xf32> to vector<1x1x256xf32>
    %145 = arith.mulf %141, %144 : vector<1x1x256xf32>
    %146 = arith.addf %131, %145 : vector<1x1x256xf32>
    %c6 = arith.constant 6 : index
    %147 = memref.load %arg10[%c6] : memref<19xf32, #tpu.memory_space<smem>>
    %148 = vector.broadcast %147 : f32 to vector<1x1x256xf32>
    %149 = arith.mulf %58, %148 : vector<1x1x256xf32>
    %c15 = arith.constant 15 : index
    %150 = memref.load %arg10[%c15] : memref<19xf32, #tpu.memory_space<smem>>
    %151 = vector.broadcast %150 : f32 to vector<1x1x256xf32>
    %152 = arith.mulf %62, %151 : vector<1x1x256xf32>
    %153 = arith.addf %149, %152 : vector<1x1x256xf32>
    %154 = vector.extract_strided_slice %153 {offsets = [0, 0, 15], sizes = [1, 1, 241], strides = [1, 1, 1]} : vector<1x1x256xf32> to vector<1x1x241xf32>
    %155 = vector.extract_strided_slice %153 {offsets = [0, 0, 0], sizes = [1, 1, 15], strides = [1, 1, 1]} : vector<1x1x256xf32> to vector<1x1x15xf32>
    %156 = tpu.concatenate %154, %155 in 2 : vector<1x1x241xf32>, vector<1x1x15xf32> -> vector<1x1x256xf32>
    %c6_52 = arith.constant 6 : index
    %c0_53 = arith.constant 0 : index
    %c0_54 = arith.constant 0 : index
    %157 = vector.load %arg2[%c6_52, %c0_53, %c0_54] : memref<9x1x256xf32, #tpu.memory_space<vmem>>, vector<1x1x256xf32>
    %158 = vector.shape_cast %157 : vector<1x1x256xf32> to vector<1x256xf32>
    %159 = vector.shape_cast %158 : vector<1x256xf32> to vector<1x1x256xf32>
    %160 = arith.mulf %156, %159 : vector<1x1x256xf32>
    %161 = arith.addf %146, %160 : vector<1x1x256xf32>
    %c7 = arith.constant 7 : index
    %162 = memref.load %arg10[%c7] : memref<19xf32, #tpu.memory_space<smem>>
    %163 = vector.broadcast %162 : f32 to vector<1x1x256xf32>
    %164 = arith.mulf %58, %163 : vector<1x1x256xf32>
    %c16 = arith.constant 16 : index
    %165 = memref.load %arg10[%c16] : memref<19xf32, #tpu.memory_space<smem>>
    %166 = vector.broadcast %165 : f32 to vector<1x1x256xf32>
    %167 = arith.mulf %62, %166 : vector<1x1x256xf32>
    %168 = arith.addf %164, %167 : vector<1x1x256xf32>
    %169 = vector.extract_strided_slice %168 {offsets = [0, 0, 16], sizes = [1, 1, 240], strides = [1, 1, 1]} : vector<1x1x256xf32> to vector<1x1x240xf32>
    %170 = vector.extract_strided_slice %168 {offsets = [0, 0, 0], sizes = [1, 1, 16], strides = [1, 1, 1]} : vector<1x1x256xf32> to vector<1x1x16xf32>
    %171 = tpu.concatenate %169, %170 in 2 : vector<1x1x240xf32>, vector<1x1x16xf32> -> vector<1x1x256xf32>
    %c7_55 = arith.constant 7 : index
    %c0_56 = arith.constant 0 : index
    %c0_57 = arith.constant 0 : index
    %172 = vector.load %arg2[%c7_55, %c0_56, %c0_57] : memref<9x1x256xf32, #tpu.memory_space<vmem>>, vector<1x1x256xf32>
    %173 = vector.shape_cast %172 : vector<1x1x256xf32> to vector<1x256xf32>
    %174 = vector.shape_cast %173 : vector<1x256xf32> to vector<1x1x256xf32>
    %175 = arith.mulf %171, %174 : vector<1x1x256xf32>
    %176 = arith.addf %161, %175 : vector<1x1x256xf32>
    %c8 = arith.constant 8 : index
    %177 = memref.load %arg10[%c8] : memref<19xf32, #tpu.memory_space<smem>>
    %178 = vector.broadcast %177 : f32 to vector<1x1x256xf32>
    %179 = arith.mulf %58, %178 : vector<1x1x256xf32>
    %c17 = arith.constant 17 : index
    %180 = memref.load %arg10[%c17] : memref<19xf32, #tpu.memory_space<smem>>
    %181 = vector.broadcast %180 : f32 to vector<1x1x256xf32>
    %182 = arith.mulf %62, %181 : vector<1x1x256xf32>
    %183 = arith.addf %179, %182 : vector<1x1x256xf32>
    %184 = vector.extract_strided_slice %183 {offsets = [0, 0, 17], sizes = [1, 1, 239], strides = [1, 1, 1]} : vector<1x1x256xf32> to vector<1x1x239xf32>
    %185 = vector.extract_strided_slice %183 {offsets = [0, 0, 0], sizes = [1, 1, 17], strides = [1, 1, 1]} : vector<1x1x256xf32> to vector<1x1x17xf32>
    %186 = tpu.concatenate %184, %185 in 2 : vector<1x1x239xf32>, vector<1x1x17xf32> -> vector<1x1x256xf32>
    %c8_58 = arith.constant 8 : index
    %c0_59 = arith.constant 0 : index
    %c0_60 = arith.constant 0 : index
    %187 = vector.load %arg2[%c8_58, %c0_59, %c0_60] : memref<9x1x256xf32, #tpu.memory_space<vmem>>, vector<1x1x256xf32>
    %188 = vector.shape_cast %187 : vector<1x1x256xf32> to vector<1x256xf32>
    %189 = vector.shape_cast %188 : vector<1x256xf32> to vector<1x1x256xf32>
    %190 = arith.mulf %186, %189 : vector<1x1x256xf32>
    %191 = arith.addf %176, %190 : vector<1x1x256xf32>
    %c18 = arith.constant 18 : index
    %192 = memref.load %arg10[%c18] : memref<19xf32, #tpu.memory_space<smem>>
    %193 = vector.broadcast %192 : f32 to vector<1x1x256xf32>
    %194 = arith.addf %191, %193 : vector<1x1x256xf32>
    %195 = arith.negf %194 : vector<1x1x256xf32>
    %196 = math.exp %195 : vector<1x1x256xf32>
    %cst_61 = arith.constant 1.000000e+00 : f32
    %197 = vector.broadcast %cst_61 : f32 to vector<1x1x256xf32>
    %198 = arith.addf %197, %196 : vector<1x1x256xf32>
    %199 = arith.divf %197, %198 : vector<1x1x256xf32>
    %200 = vector.broadcast %199 : vector<1x1x256xf32> to vector<1x4x256xf32>
    %201 = arith.mulf %200, %56 : vector<1x4x256xf32>
    %202 = vector.extract_strided_slice %0 {offsets = [0, 0, 0], sizes = [1, 1, 256], strides = [1, 1, 1]} : vector<1x4x256xf32> to vector<1x1x256xf32>
    %c0_62 = arith.constant 0 : index
    %c0_63 = arith.constant 0 : index
    %c0_64 = arith.constant 0 : index
    %203 = vector.load %arg7[%c0_62, %c0_63, %c0_64] : memref<4x2x1xf32, #tpu.memory_space<vmem>>, vector<1x2x1xf32>
    %204 = vector.shape_cast %203 : vector<1x2x1xf32> to vector<2x1xf32>
    %205 = vector.shape_cast %204 : vector<2x1xf32> to vector<1x2x1xf32>
    %206 = vector.broadcast %202 : vector<1x1x256xf32> to vector<1x2x256xf32>
    %207 = vector.broadcast %205 : vector<1x2x1xf32> to vector<1x2x256xf32>
    %208 = arith.mulf %206, %207 : vector<1x2x256xf32>
    %209 = vector.extract_strided_slice %0 {offsets = [0, 1, 0], sizes = [1, 1, 256], strides = [1, 1, 1]} : vector<1x4x256xf32> to vector<1x1x256xf32>
    %c1_65 = arith.constant 1 : index
    %c0_66 = arith.constant 0 : index
    %c0_67 = arith.constant 0 : index
    %210 = vector.load %arg7[%c1_65, %c0_66, %c0_67] : memref<4x2x1xf32, #tpu.memory_space<vmem>>, vector<1x2x1xf32>
    %211 = vector.shape_cast %210 : vector<1x2x1xf32> to vector<2x1xf32>
    %212 = vector.shape_cast %211 : vector<2x1xf32> to vector<1x2x1xf32>
    %213 = vector.broadcast %209 : vector<1x1x256xf32> to vector<1x2x256xf32>
    %214 = vector.broadcast %212 : vector<1x2x1xf32> to vector<1x2x256xf32>
    %215 = arith.mulf %213, %214 : vector<1x2x256xf32>
    %216 = arith.addf %208, %215 : vector<1x2x256xf32>
    %217 = vector.extract_strided_slice %0 {offsets = [0, 2, 0], sizes = [1, 1, 256], strides = [1, 1, 1]} : vector<1x4x256xf32> to vector<1x1x256xf32>
    %c2_68 = arith.constant 2 : index
    %c0_69 = arith.constant 0 : index
    %c0_70 = arith.constant 0 : index
    %218 = vector.load %arg7[%c2_68, %c0_69, %c0_70] : memref<4x2x1xf32, #tpu.memory_space<vmem>>, vector<1x2x1xf32>
    %219 = vector.shape_cast %218 : vector<1x2x1xf32> to vector<2x1xf32>
    %220 = vector.shape_cast %219 : vector<2x1xf32> to vector<1x2x1xf32>
    %221 = vector.broadcast %217 : vector<1x1x256xf32> to vector<1x2x256xf32>
    %222 = vector.broadcast %220 : vector<1x2x1xf32> to vector<1x2x256xf32>
    %223 = arith.mulf %221, %222 : vector<1x2x256xf32>
    %224 = arith.addf %216, %223 : vector<1x2x256xf32>
    %225 = vector.extract_strided_slice %0 {offsets = [0, 3, 0], sizes = [1, 1, 256], strides = [1, 1, 1]} : vector<1x4x256xf32> to vector<1x1x256xf32>
    %c3_71 = arith.constant 3 : index
    %c0_72 = arith.constant 0 : index
    %c0_73 = arith.constant 0 : index
    %226 = vector.load %arg7[%c3_71, %c0_72, %c0_73] : memref<4x2x1xf32, #tpu.memory_space<vmem>>, vector<1x2x1xf32>
    %227 = vector.shape_cast %226 : vector<1x2x1xf32> to vector<2x1xf32>
    %228 = vector.shape_cast %227 : vector<2x1xf32> to vector<1x2x1xf32>
    %229 = vector.broadcast %225 : vector<1x1x256xf32> to vector<1x2x256xf32>
    %230 = vector.broadcast %228 : vector<1x2x1xf32> to vector<1x2x256xf32>
    %231 = arith.mulf %229, %230 : vector<1x2x256xf32>
    %232 = arith.addf %224, %231 : vector<1x2x256xf32>
    %c0_74 = arith.constant 0 : index
    %c0_75 = arith.constant 0 : index
    %c0_76 = arith.constant 0 : index
    %233 = vector.load %arg9[%c0_74, %c0_75, %c0_76] : memref<4x2x1xf32, #tpu.memory_space<vmem>>, vector<1x2x1xf32>
    %234 = vector.shape_cast %233 : vector<1x2x1xf32> to vector<2x1xf32>
    %235 = vector.shape_cast %234 : vector<2x1xf32> to vector<1x2x1xf32>
    %236 = vector.broadcast %235 : vector<1x2x1xf32> to vector<1x2x256xf32>
    %237 = arith.mulf %232, %236 : vector<1x2x256xf32>
    %c1_77 = arith.constant 1 : index
    %c0_78 = arith.constant 0 : index
    %c0_79 = arith.constant 0 : index
    %238 = vector.load %arg9[%c1_77, %c0_78, %c0_79] : memref<4x2x1xf32, #tpu.memory_space<vmem>>, vector<1x2x1xf32>
    %239 = vector.shape_cast %238 : vector<1x2x1xf32> to vector<2x1xf32>
    %240 = vector.shape_cast %239 : vector<2x1xf32> to vector<1x2x1xf32>
    %241 = vector.broadcast %240 : vector<1x2x1xf32> to vector<1x2x256xf32>
    %242 = arith.addf %237, %241 : vector<1x2x256xf32>
    %cst_80 = arith.constant 0.000000e+00 : f32
    %243 = vector.broadcast %cst_80 : f32 to vector<1x2x256xf32>
    %244 = arith.maximumf %242, %243 : vector<1x2x256xf32>
    %cst_81 = arith.constant 0.000000e+00 : f32
    %245 = vector.broadcast %cst_81 : f32 to vector<1x2x256xf32>
    %246 = vector.extract_strided_slice %244 {offsets = [0, 0, 239], sizes = [1, 2, 17], strides = [1, 1, 1]} : vector<1x2x256xf32> to vector<1x2x17xf32>
    %247 = vector.extract_strided_slice %244 {offsets = [0, 0, 0], sizes = [1, 2, 239], strides = [1, 1, 1]} : vector<1x2x256xf32> to vector<1x2x239xf32>
    %248 = tpu.concatenate %246, %247 in 2 : vector<1x2x17xf32>, vector<1x2x239xf32> -> vector<1x2x256xf32>
    %c0_82 = arith.constant 0 : index
    %c0_83 = arith.constant 0 : index
    %c0_84 = arith.constant 0 : index
    %249 = vector.load %arg2[%c0_82, %c0_83, %c0_84] : memref<9x1x256xf32, #tpu.memory_space<vmem>>, vector<1x1x256xf32>
    %250 = vector.shape_cast %249 : vector<1x1x256xf32> to vector<1x256xf32>
    %251 = vector.shape_cast %250 : vector<1x256xf32> to vector<1x1x256xf32>
    %252 = vector.broadcast %251 : vector<1x1x256xf32> to vector<1x2x256xf32>
    %253 = arith.mulf %248, %252 : vector<1x2x256xf32>
    %c0_85 = arith.constant 0 : index
    %c0_86 = arith.constant 0 : index
    %c0_87 = arith.constant 0 : index
    %254 = vector.load %arg8[%c0_85, %c0_86, %c0_87] : memref<9x2x1xf32, #tpu.memory_space<vmem>>, vector<1x2x1xf32>
    %255 = vector.shape_cast %254 : vector<1x2x1xf32> to vector<2x1xf32>
    %256 = vector.shape_cast %255 : vector<2x1xf32> to vector<1x2x1xf32>
    %257 = vector.broadcast %256 : vector<1x2x1xf32> to vector<1x2x256xf32>
    %258 = arith.mulf %253, %257 : vector<1x2x256xf32>
    %259 = arith.addf %245, %258 : vector<1x2x256xf32>
    %260 = vector.extract_strided_slice %244 {offsets = [0, 0, 240], sizes = [1, 2, 16], strides = [1, 1, 1]} : vector<1x2x256xf32> to vector<1x2x16xf32>
    %261 = vector.extract_strided_slice %244 {offsets = [0, 0, 0], sizes = [1, 2, 240], strides = [1, 1, 1]} : vector<1x2x256xf32> to vector<1x2x240xf32>
    %262 = tpu.concatenate %260, %261 in 2 : vector<1x2x16xf32>, vector<1x2x240xf32> -> vector<1x2x256xf32>
    %c1_88 = arith.constant 1 : index
    %c0_89 = arith.constant 0 : index
    %c0_90 = arith.constant 0 : index
    %263 = vector.load %arg2[%c1_88, %c0_89, %c0_90] : memref<9x1x256xf32, #tpu.memory_space<vmem>>, vector<1x1x256xf32>
    %264 = vector.shape_cast %263 : vector<1x1x256xf32> to vector<1x256xf32>
    %265 = vector.shape_cast %264 : vector<1x256xf32> to vector<1x1x256xf32>
    %266 = vector.broadcast %265 : vector<1x1x256xf32> to vector<1x2x256xf32>
    %267 = arith.mulf %262, %266 : vector<1x2x256xf32>
    %c1_91 = arith.constant 1 : index
    %c0_92 = arith.constant 0 : index
    %c0_93 = arith.constant 0 : index
    %268 = vector.load %arg8[%c1_91, %c0_92, %c0_93] : memref<9x2x1xf32, #tpu.memory_space<vmem>>, vector<1x2x1xf32>
    %269 = vector.shape_cast %268 : vector<1x2x1xf32> to vector<2x1xf32>
    %270 = vector.shape_cast %269 : vector<2x1xf32> to vector<1x2x1xf32>
    %271 = vector.broadcast %270 : vector<1x2x1xf32> to vector<1x2x256xf32>
    %272 = arith.mulf %267, %271 : vector<1x2x256xf32>
    %273 = arith.addf %259, %272 : vector<1x2x256xf32>
    %274 = vector.extract_strided_slice %244 {offsets = [0, 0, 241], sizes = [1, 2, 15], strides = [1, 1, 1]} : vector<1x2x256xf32> to vector<1x2x15xf32>
    %275 = vector.extract_strided_slice %244 {offsets = [0, 0, 0], sizes = [1, 2, 241], strides = [1, 1, 1]} : vector<1x2x256xf32> to vector<1x2x241xf32>
    %276 = tpu.concatenate %274, %275 in 2 : vector<1x2x15xf32>, vector<1x2x241xf32> -> vector<1x2x256xf32>
    %c2_94 = arith.constant 2 : index
    %c0_95 = arith.constant 0 : index
    %c0_96 = arith.constant 0 : index
    %277 = vector.load %arg2[%c2_94, %c0_95, %c0_96] : memref<9x1x256xf32, #tpu.memory_space<vmem>>, vector<1x1x256xf32>
    %278 = vector.shape_cast %277 : vector<1x1x256xf32> to vector<1x256xf32>
    %279 = vector.shape_cast %278 : vector<1x256xf32> to vector<1x1x256xf32>
    %280 = vector.broadcast %279 : vector<1x1x256xf32> to vector<1x2x256xf32>
    %281 = arith.mulf %276, %280 : vector<1x2x256xf32>
    %c2_97 = arith.constant 2 : index
    %c0_98 = arith.constant 0 : index
    %c0_99 = arith.constant 0 : index
    %282 = vector.load %arg8[%c2_97, %c0_98, %c0_99] : memref<9x2x1xf32, #tpu.memory_space<vmem>>, vector<1x2x1xf32>
    %283 = vector.shape_cast %282 : vector<1x2x1xf32> to vector<2x1xf32>
    %284 = vector.shape_cast %283 : vector<2x1xf32> to vector<1x2x1xf32>
    %285 = vector.broadcast %284 : vector<1x2x1xf32> to vector<1x2x256xf32>
    %286 = arith.mulf %281, %285 : vector<1x2x256xf32>
    %287 = arith.addf %273, %286 : vector<1x2x256xf32>
    %288 = vector.extract_strided_slice %244 {offsets = [0, 0, 255], sizes = [1, 2, 1], strides = [1, 1, 1]} : vector<1x2x256xf32> to vector<1x2x1xf32>
    %289 = vector.extract_strided_slice %244 {offsets = [0, 0, 0], sizes = [1, 2, 255], strides = [1, 1, 1]} : vector<1x2x256xf32> to vector<1x2x255xf32>
    %290 = tpu.concatenate %288, %289 in 2 : vector<1x2x1xf32>, vector<1x2x255xf32> -> vector<1x2x256xf32>
    %c3_100 = arith.constant 3 : index
    %c0_101 = arith.constant 0 : index
    %c0_102 = arith.constant 0 : index
    %291 = vector.load %arg2[%c3_100, %c0_101, %c0_102] : memref<9x1x256xf32, #tpu.memory_space<vmem>>, vector<1x1x256xf32>
    %292 = vector.shape_cast %291 : vector<1x1x256xf32> to vector<1x256xf32>
    %293 = vector.shape_cast %292 : vector<1x256xf32> to vector<1x1x256xf32>
    %294 = vector.broadcast %293 : vector<1x1x256xf32> to vector<1x2x256xf32>
    %295 = arith.mulf %290, %294 : vector<1x2x256xf32>
    %c3_103 = arith.constant 3 : index
    %c0_104 = arith.constant 0 : index
    %c0_105 = arith.constant 0 : index
    %296 = vector.load %arg8[%c3_103, %c0_104, %c0_105] : memref<9x2x1xf32, #tpu.memory_space<vmem>>, vector<1x2x1xf32>
    %297 = vector.shape_cast %296 : vector<1x2x1xf32> to vector<2x1xf32>
    %298 = vector.shape_cast %297 : vector<2x1xf32> to vector<1x2x1xf32>
    %299 = vector.broadcast %298 : vector<1x2x1xf32> to vector<1x2x256xf32>
    %300 = arith.mulf %295, %299 : vector<1x2x256xf32>
    %301 = arith.addf %287, %300 : vector<1x2x256xf32>
    %c4_106 = arith.constant 4 : index
    %c0_107 = arith.constant 0 : index
    %c0_108 = arith.constant 0 : index
    %302 = vector.load %arg8[%c4_106, %c0_107, %c0_108] : memref<9x2x1xf32, #tpu.memory_space<vmem>>, vector<1x2x1xf32>
    %303 = vector.shape_cast %302 : vector<1x2x1xf32> to vector<2x1xf32>
    %304 = vector.shape_cast %303 : vector<2x1xf32> to vector<1x2x1xf32>
    %305 = vector.broadcast %304 : vector<1x2x1xf32> to vector<1x2x256xf32>
    %306 = arith.mulf %244, %305 : vector<1x2x256xf32>
    %307 = arith.addf %301, %306 : vector<1x2x256xf32>
    %308 = vector.extract_strided_slice %244 {offsets = [0, 0, 1], sizes = [1, 2, 255], strides = [1, 1, 1]} : vector<1x2x256xf32> to vector<1x2x255xf32>
    %309 = vector.extract_strided_slice %244 {offsets = [0, 0, 0], sizes = [1, 2, 1], strides = [1, 1, 1]} : vector<1x2x256xf32> to vector<1x2x1xf32>
    %310 = tpu.concatenate %308, %309 in 2 : vector<1x2x255xf32>, vector<1x2x1xf32> -> vector<1x2x256xf32>
    %c5_109 = arith.constant 5 : index
    %c0_110 = arith.constant 0 : index
    %c0_111 = arith.constant 0 : index
    %311 = vector.load %arg2[%c5_109, %c0_110, %c0_111] : memref<9x1x256xf32, #tpu.memory_space<vmem>>, vector<1x1x256xf32>
    %312 = vector.shape_cast %311 : vector<1x1x256xf32> to vector<1x256xf32>
    %313 = vector.shape_cast %312 : vector<1x256xf32> to vector<1x1x256xf32>
    %314 = vector.broadcast %313 : vector<1x1x256xf32> to vector<1x2x256xf32>
    %315 = arith.mulf %310, %314 : vector<1x2x256xf32>
    %c5_112 = arith.constant 5 : index
    %c0_113 = arith.constant 0 : index
    %c0_114 = arith.constant 0 : index
    %316 = vector.load %arg8[%c5_112, %c0_113, %c0_114] : memref<9x2x1xf32, #tpu.memory_space<vmem>>, vector<1x2x1xf32>
    %317 = vector.shape_cast %316 : vector<1x2x1xf32> to vector<2x1xf32>
    %318 = vector.shape_cast %317 : vector<2x1xf32> to vector<1x2x1xf32>
    %319 = vector.broadcast %318 : vector<1x2x1xf32> to vector<1x2x256xf32>
    %320 = arith.mulf %315, %319 : vector<1x2x256xf32>
    %321 = arith.addf %307, %320 : vector<1x2x256xf32>
    %322 = vector.extract_strided_slice %244 {offsets = [0, 0, 15], sizes = [1, 2, 241], strides = [1, 1, 1]} : vector<1x2x256xf32> to vector<1x2x241xf32>
    %323 = vector.extract_strided_slice %244 {offsets = [0, 0, 0], sizes = [1, 2, 15], strides = [1, 1, 1]} : vector<1x2x256xf32> to vector<1x2x15xf32>
    %324 = tpu.concatenate %322, %323 in 2 : vector<1x2x241xf32>, vector<1x2x15xf32> -> vector<1x2x256xf32>
    %c6_115 = arith.constant 6 : index
    %c0_116 = arith.constant 0 : index
    %c0_117 = arith.constant 0 : index
    %325 = vector.load %arg2[%c6_115, %c0_116, %c0_117] : memref<9x1x256xf32, #tpu.memory_space<vmem>>, vector<1x1x256xf32>
    %326 = vector.shape_cast %325 : vector<1x1x256xf32> to vector<1x256xf32>
    %327 = vector.shape_cast %326 : vector<1x256xf32> to vector<1x1x256xf32>
    %328 = vector.broadcast %327 : vector<1x1x256xf32> to vector<1x2x256xf32>
    %329 = arith.mulf %324, %328 : vector<1x2x256xf32>
    %c6_118 = arith.constant 6 : index
    %c0_119 = arith.constant 0 : index
    %c0_120 = arith.constant 0 : index
    %330 = vector.load %arg8[%c6_118, %c0_119, %c0_120] : memref<9x2x1xf32, #tpu.memory_space<vmem>>, vector<1x2x1xf32>
    %331 = vector.shape_cast %330 : vector<1x2x1xf32> to vector<2x1xf32>
    %332 = vector.shape_cast %331 : vector<2x1xf32> to vector<1x2x1xf32>
    %333 = vector.broadcast %332 : vector<1x2x1xf32> to vector<1x2x256xf32>
    %334 = arith.mulf %329, %333 : vector<1x2x256xf32>
    %335 = arith.addf %321, %334 : vector<1x2x256xf32>
    %336 = vector.extract_strided_slice %244 {offsets = [0, 0, 16], sizes = [1, 2, 240], strides = [1, 1, 1]} : vector<1x2x256xf32> to vector<1x2x240xf32>
    %337 = vector.extract_strided_slice %244 {offsets = [0, 0, 0], sizes = [1, 2, 16], strides = [1, 1, 1]} : vector<1x2x256xf32> to vector<1x2x16xf32>
    %338 = tpu.concatenate %336, %337 in 2 : vector<1x2x240xf32>, vector<1x2x16xf32> -> vector<1x2x256xf32>
    %c7_121 = arith.constant 7 : index
    %c0_122 = arith.constant 0 : index
    %c0_123 = arith.constant 0 : index
    %339 = vector.load %arg2[%c7_121, %c0_122, %c0_123] : memref<9x1x256xf32, #tpu.memory_space<vmem>>, vector<1x1x256xf32>
    %340 = vector.shape_cast %339 : vector<1x1x256xf32> to vector<1x256xf32>
    %341 = vector.shape_cast %340 : vector<1x256xf32> to vector<1x1x256xf32>
    %342 = vector.broadcast %341 : vector<1x1x256xf32> to vector<1x2x256xf32>
    %343 = arith.mulf %338, %342 : vector<1x2x256xf32>
    %c7_124 = arith.constant 7 : index
    %c0_125 = arith.constant 0 : index
    %c0_126 = arith.constant 0 : index
    %344 = vector.load %arg8[%c7_124, %c0_125, %c0_126] : memref<9x2x1xf32, #tpu.memory_space<vmem>>, vector<1x2x1xf32>
    %345 = vector.shape_cast %344 : vector<1x2x1xf32> to vector<2x1xf32>
    %346 = vector.shape_cast %345 : vector<2x1xf32> to vector<1x2x1xf32>
    %347 = vector.broadcast %346 : vector<1x2x1xf32> to vector<1x2x256xf32>
    %348 = arith.mulf %343, %347 : vector<1x2x256xf32>
    %349 = arith.addf %335, %348 : vector<1x2x256xf32>
    %350 = vector.extract_strided_slice %244 {offsets = [0, 0, 17], sizes = [1, 2, 239], strides = [1, 1, 1]} : vector<1x2x256xf32> to vector<1x2x239xf32>
    %351 = vector.extract_strided_slice %244 {offsets = [0, 0, 0], sizes = [1, 2, 17], strides = [1, 1, 1]} : vector<1x2x256xf32> to vector<1x2x17xf32>
    %352 = tpu.concatenate %350, %351 in 2 : vector<1x2x239xf32>, vector<1x2x17xf32> -> vector<1x2x256xf32>
    %c8_127 = arith.constant 8 : index
    %c0_128 = arith.constant 0 : index
    %c0_129 = arith.constant 0 : index
    %353 = vector.load %arg2[%c8_127, %c0_128, %c0_129] : memref<9x1x256xf32, #tpu.memory_space<vmem>>, vector<1x1x256xf32>
    %354 = vector.shape_cast %353 : vector<1x1x256xf32> to vector<1x256xf32>
    %355 = vector.shape_cast %354 : vector<1x256xf32> to vector<1x1x256xf32>
    %356 = vector.broadcast %355 : vector<1x1x256xf32> to vector<1x2x256xf32>
    %357 = arith.mulf %352, %356 : vector<1x2x256xf32>
    %c8_130 = arith.constant 8 : index
    %c0_131 = arith.constant 0 : index
    %c0_132 = arith.constant 0 : index
    %358 = vector.load %arg8[%c8_130, %c0_131, %c0_132] : memref<9x2x1xf32, #tpu.memory_space<vmem>>, vector<1x2x1xf32>
    %359 = vector.shape_cast %358 : vector<1x2x1xf32> to vector<2x1xf32>
    %360 = vector.shape_cast %359 : vector<2x1xf32> to vector<1x2x1xf32>
    %361 = vector.broadcast %360 : vector<1x2x1xf32> to vector<1x2x256xf32>
    %362 = arith.mulf %357, %361 : vector<1x2x256xf32>
    %363 = arith.addf %349, %362 : vector<1x2x256xf32>
    %c2_133 = arith.constant 2 : index
    %c0_134 = arith.constant 0 : index
    %c0_135 = arith.constant 0 : index
    %364 = vector.load %arg9[%c2_133, %c0_134, %c0_135] : memref<4x2x1xf32, #tpu.memory_space<vmem>>, vector<1x2x1xf32>
    %365 = vector.shape_cast %364 : vector<1x2x1xf32> to vector<2x1xf32>
    %366 = vector.shape_cast %365 : vector<2x1xf32> to vector<1x2x1xf32>
    %367 = vector.broadcast %366 : vector<1x2x1xf32> to vector<1x2x256xf32>
    %368 = arith.mulf %363, %367 : vector<1x2x256xf32>
    %c3_136 = arith.constant 3 : index
    %c0_137 = arith.constant 0 : index
    %c0_138 = arith.constant 0 : index
    %369 = vector.load %arg9[%c3_136, %c0_137, %c0_138] : memref<4x2x1xf32, #tpu.memory_space<vmem>>, vector<1x2x1xf32>
    %370 = vector.shape_cast %369 : vector<1x2x1xf32> to vector<2x1xf32>
    %371 = vector.shape_cast %370 : vector<2x1xf32> to vector<1x2x1xf32>
    %372 = vector.broadcast %371 : vector<1x2x1xf32> to vector<1x2x256xf32>
    %373 = arith.addf %368, %372 : vector<1x2x256xf32>
    %cst_139 = arith.constant 0.000000e+00 : f32
    %374 = vector.broadcast %cst_139 : f32 to vector<1x2x256xf32>
    %375 = arith.maximumf %373, %374 : vector<1x2x256xf32>
    %376 = tpu.concatenate %244, %375 in 1 : vector<1x2x256xf32>, vector<1x2x256xf32> -> vector<1x4x256xf32>
    %377 = arith.addf %376, %201 : vector<1x4x256xf32>
    %378 = arith.addf %377, %0 : vector<1x4x256xf32>
    %c0_140 = arith.constant 0 : index
    %c0_141 = arith.constant 0 : index
    %c0_142 = arith.constant 0 : index
    %379 = vector.load %arg11[%c0_140, %c0_141, %c0_142] : memref<1x4x256xf32, #tpu.memory_space<vmem>>, vector<1x4x256xf32>
    tpu.vector_store %arg11[%c0_140, %c0_141, %c0_142], %378 {strides = array<i32>} : memref<1x4x256xf32, #tpu.memory_space<vmem>>, vector<1x4x256xf32>,
    return
  }
  func.func @transform_0(%arg0: i32) -> (i32, i32, i32) {
    %c0_i32 = arith.constant 0 : i32
    %c0_i32_0 = arith.constant 0 : i32
    %c0_i32_1 = arith.constant 0 : i32
    return %arg0, %c0_i32, %c0_i32_0 : i32, i32, i32
  }
  func.func @transform_1(%arg0: i32) -> (i32, i32, i32) {
    %c0_i32 = arith.constant 0 : i32
    %c0_i32_0 = arith.constant 0 : i32
    %c0_i32_1 = arith.constant 0 : i32
    %c0_i32_2 = arith.constant 0 : i32
    return %c0_i32, %c0_i32_0, %c0_i32_1 : i32, i32, i32
  }
  func.func @transform_2(%arg0: i32) -> (i32, i32, i32) {
    %c0_i32 = arith.constant 0 : i32
    %c0_i32_0 = arith.constant 0 : i32
    %c0_i32_1 = arith.constant 0 : i32
    %c0_i32_2 = arith.constant 0 : i32
    return %c0_i32, %c0_i32_0, %c0_i32_1 : i32, i32, i32
  }
  func.func @transform_3(%arg0: i32) -> (i32, i32, i32) {
    %c0_i32 = arith.constant 0 : i32
    %c0_i32_0 = arith.constant 0 : i32
    %c0_i32_1 = arith.constant 0 : i32
    %c0_i32_2 = arith.constant 0 : i32
    return %c0_i32, %c0_i32_0, %c0_i32_1 : i32, i32, i32
  }
  func.func @transform_4(%arg0: i32) -> (i32, i32, i32) {
    %c0_i32 = arith.constant 0 : i32
    %c0_i32_0 = arith.constant 0 : i32
    %c0_i32_1 = arith.constant 0 : i32
    %c0_i32_2 = arith.constant 0 : i32
    return %c0_i32, %c0_i32_0, %c0_i32_1 : i32, i32, i32
  }
  func.func @transform_5(%arg0: i32) -> (i32, i32, i32) {
    %c0_i32 = arith.constant 0 : i32
    %c0_i32_0 = arith.constant 0 : i32
    %c0_i32_1 = arith.constant 0 : i32
    %c0_i32_2 = arith.constant 0 : i32
    return %c0_i32, %c0_i32_0, %c0_i32_1 : i32, i32, i32
  }
  func.func @transform_6(%arg0: i32) -> (i32, i32, i32) {
    %c0_i32 = arith.constant 0 : i32
    %c0_i32_0 = arith.constant 0 : i32
    %c0_i32_1 = arith.constant 0 : i32
    %c0_i32_2 = arith.constant 0 : i32
    return %c0_i32, %c0_i32_0, %c0_i32_1 : i32, i32, i32
  }
  func.func @transform_7(%arg0: i32) -> (i32, i32, i32) {
    %c0_i32 = arith.constant 0 : i32
    %c0_i32_0 = arith.constant 0 : i32
    %c0_i32_1 = arith.constant 0 : i32
    %c0_i32_2 = arith.constant 0 : i32
    return %c0_i32, %c0_i32_0, %c0_i32_1 : i32, i32, i32
  }
  func.func @transform_8(%arg0: i32) -> (i32, i32, i32) {
    %c0_i32 = arith.constant 0 : i32
    %c0_i32_0 = arith.constant 0 : i32
    %c0_i32_1 = arith.constant 0 : i32
    %c0_i32_2 = arith.constant 0 : i32
    return %c0_i32, %c0_i32_0, %c0_i32_1 : i32, i32, i32
  }
  func.func @transform_9(%arg0: i32) -> i32 {
    %c0_i32 = arith.constant 0 : i32
    %c0_i32_0 = arith.constant 0 : i32
    return %c0_i32 : i32
  }
  func.func @transform_10(%arg0: i32) -> (i32, i32, i32) {
    %c0_i32 = arith.constant 0 : i32
    %c0_i32_0 = arith.constant 0 : i32
    %c0_i32_1 = arith.constant 0 : i32
    return %arg0, %c0_i32, %c0_i32_0 : i32, i32, i32
  }
}

</mosaic_0001>

<llo_original>
// kernel: tpu_custom_call.1
$region0: #{tpu_custom_call.1}
  #allocation0 [shape = 'u32[]', space=smem, size = 0x4, offset = 0x4, fixed_abs, tag = 'smem constant byte address 0x4 - core index']
  #allocation1 [shape = 'u32[144,128]{1,0:T(1,128)}', space=vmem, size = 0x12000, scoped, tag = 'internal scratch']
  %s0 = inlined_call_operand.vmem [shape: f32[2,4,256], index: 0, kind: input, shape index: {}]
  %s1 = inlined_call_operand.vmem [shape: f32[9,1,256], index: 1, kind: input, shape index: {}]
  %s2 = inlined_call_operand.vmem [shape: f32[2,4,2], index: 2, kind: input, shape index: {}]
  %s3 = inlined_call_operand.vmem [shape: f32[2,1,2], index: 3, kind: input, shape index: {}]
  %s4 = inlined_call_operand.vmem [shape: f32[2,4,2], index: 4, kind: input, shape index: {}]
  %s5 = inlined_call_operand.vmem [shape: f32[1,4,1], index: 5, kind: input, shape index: {}]
  %s6 = inlined_call_operand.vmem [shape: f32[4,2,1], index: 6, kind: input, shape index: {}]
  %s7 = inlined_call_operand.vmem [shape: f32[9,2,1], index: 7, kind: input, shape index: {}]
  %s8 = inlined_call_operand.vmem [shape: f32[4,2,1], index: 8, kind: input, shape index: {}]
  %s9 = inlined_call_operand.vmem [shape: f32[19], index: 9, kind: input, shape index: {}]
  %s10 = inlined_call_operand.hbm [shape: f32[2,4,256], index: 10, kind: output, shape index: {}]
  %s11 = sld [smem:[#allocation0]]
  $region77: #{tpu_custom_call.1} parent=0
    _
  %s13 = ssub.s32 1, %s11
  %s14 = scalar_select 0, %s13, %s11
  $region1: #{tpu_custom_call.1} parent=0
    #allocation2 [shape = 'u8[512]{0}', space=smem, size = 0x200, scoped, tag = 'input window, operand 9, single buffered']
    #allocation3 [shape = 's32[2]{0}', space=sflag, size = 0x8, scoped, tag = 'scoped memory for tpu_custom_call.1']
    #allocation4 [shape = 's32[2]{0}', space=sflag, size = 0x8, scoped, tag = 'scoped memory for tpu_custom_call.1']
    #allocation5 [shape = 'u8[8192]{0}', space=vmem, size = 0x2000, scoped, tag = 'output window, operand 0']
    %15 = vsyncpa [#allocation4], 0
    %16 = vsyncpa [#allocation3], 0
    %s17 = scalar_lea.sflag [#allocation3], 1
    %18 = vsyncpa %s17, 0
    loop: start=0, step=1, limit=4
    $region2: #{tpu_custom_call.1} parent=1 // loop_pre_header
      _
    $region3: #{tpu_custom_call.1} parent=1 // loop_header
      %s20 = sphi 0, %s24
      %p21 = scmp.ge.s32.totalorder %s20, 4
      %s30 = sphi 0, %s32
      %s33 = sphi 0, %s30
      %s34 = sphi 0, %s33
      %s50 = sphi 0, %s34
      %s54 = sphi 0, %s54
      %s56 = sphi 0, %s54
      %s57 = sphi 0, %s56
      %s71 = sphi 0, %s57
      %s75 = sphi 0, %s75
      %s77 = sphi 0, %s75
      %s78 = sphi 0, %s77
      %s92 = sphi 0, %s78
      %s96 = sphi 0, %s96
      %s98 = sphi 0, %s96
      %s99 = sphi 0, %s98
      %s113 = sphi 0, %s99
      %s117 = sphi 0, %s117
      %s119 = sphi 0, %s117
      %s120 = sphi 0, %s119
      %s134 = sphi 0, %s120
      %s138 = sphi 0, %s138
      %s140 = sphi 0, %s138
      %s141 = sphi 0, %s140
      %s155 = sphi 0, %s141
      %s159 = sphi 0, %s159
      %s161 = sphi 0, %s159
      %s162 = sphi 0, %s161
      %s176 = sphi 0, %s162
      %s180 = sphi 0, %s180
      %s182 = sphi 0, %s180
      %s183 = sphi 0, %s182
      %s197 = sphi 0, %s183
      %s201 = sphi 0, %s201
      %s203 = sphi 0, %s201
      %s204 = sphi 0, %s203
      %s218 = sphi 0, %s204
      %s222 = sphi 0, %s222
      %s224 = sphi 0, %s222
      %s225 = sphi 0, %s224
      %s239 = sphi 0, %s225
      %s245 = sphi 0, %s247
      %s248 = sphi 0, %s245
      %s249 = sphi 0, %s248
      %s265 = sphi 0, %s249
    $region4: #{tpu_custom_call.1} parent=1 // loop_header_branch
      %23 = sbr.rel (%p21) target = $region8
    $region5: #{tpu_custom_call.1} parent=1 // loop_body
      %s25 = ssub.s32 %s20, 1
      %s26 = ssub.s32 %s20, 2
      %s27 = sadd.s32 %s20, 1
      %s28 = ssub.s32 %s20, %s27
      %p29 = scmp.eq.s32.totalorder %s28, 0
      %s31 = sadd.s32 %s30, 1
      %s32 = scalar_select %p29, %s30, %s31
      %p35 = pneg %p29
      %p36 = scmp.eq.s32.totalorder %s20, 1
      %p37 = por %p35, %p36
      %p38 = scmp.ne.s32.totalorder %s30, %s33
      %p39 = scmp.eq.s32.totalorder %s20, 0
      %p40 = por %p38, %p39
      %p41 = scmp.ne.s32.totalorder %s30, %s33
      %p42 = scmp.eq.s32.totalorder %s25, 1
      %p43 = por %p41, %p42
      %p44 = scmp.ne.s32.totalorder %s33, %s34
      %p45 = scmp.eq.s32.totalorder %s25, 0
      %p46 = por %p44, %p45
      %p47 = scmp.ne.s32.totalorder %s33, %s34
      %p48 = scmp.eq.s32.totalorder %s26, 1
      %p49 = por %p47, %p48
      %p51 = scmp.ne.s32.totalorder %s34, %s50
      %p52 = scmp.eq.s32.totalorder %s26, 0
      %p53 = por %p51, %p52
      %s55 = sadd.s32 %s54, 1
      %p58 = scmp.eq.s32.totalorder %s20, 1
      %p59 = scmp.ne.s32.totalorder %s54, %s56
      %p60 = scmp.eq.s32.totalorder %s20, 0
      %p61 = por %p59, %p60
      %p62 = scmp.ne.s32.totalorder %s54, %s56
      %p63 = scmp.eq.s32.totalorder %s25, 1
      %p64 = por %p62, %p63
      %p65 = scmp.ne.s32.totalorder %s56, %s57
      %p66 = scmp.eq.s32.totalorder %s25, 0
      %p67 = por %p65, %p66
      %p68 = scmp.ne.s32.totalorder %s56, %s57
      %p69 = scmp.eq.s32.totalorder %s26, 1
      %p70 = por %p68, %p69
      %p72 = scmp.ne.s32.totalorder %s57, %s71
      %p73 = scmp.eq.s32.totalorder %s26, 0
      %p74 = por %p72, %p73
      %s76 = sadd.s32 %s75, 1
      %p79 = scmp.eq.s32.totalorder %s20, 1
      %p80 = scmp.ne.s32.totalorder %s75, %s77
      %p81 = scmp.eq.s32.totalorder %s20, 0
      %p82 = por %p80, %p81
      %p83 = scmp.ne.s32.totalorder %s75, %s77
      %p84 = scmp.eq.s32.totalorder %s25, 1
      %p85 = por %p83, %p84
      %p86 = scmp.ne.s32.totalorder %s77, %s78
      %p87 = scmp.eq.s32.totalorder %s25, 0
      %p88 = por %p86, %p87
      %p89 = scmp.ne.s32.totalorder %s77, %s78
      %p90 = scmp.eq.s32.totalorder %s26, 1
      %p91 = por %p89, %p90
      %p93 = scmp.ne.s32.totalorder %s78, %s92
      %p94 = scmp.eq.s32.totalorder %s26, 0
      %p95 = por %p93, %p94
      %s97 = sadd.s32 %s96, 1
      %p100 = scmp.eq.s32.totalorder %s20, 1
      %p101 = scmp.ne.s32.totalorder %s96, %s98
      %p102 = scmp.eq.s32.totalorder %s20, 0
      %p103 = por %p101, %p102
      %p104 = scmp.ne.s32.totalorder %s96, %s98
      %p105 = scmp.eq.s32.totalorder %s25, 1
      %p106 = por %p104, %p105
      %p107 = scmp.ne.s32.totalorder %s98, %s99
      %p108 = scmp.eq.s32.totalorder %s25, 0
      %p109 = por %p107, %p108
      %p110 = scmp.ne.s32.totalorder %s98, %s99
      %p111 = scmp.eq.s32.totalorder %s26, 1
      %p112 = por %p110, %p111
      %p114 = scmp.ne.s32.totalorder %s99, %s113
      %p115 = scmp.eq.s32.totalorder %s26, 0
      %p116 = por %p114, %p115
      %s118 = sadd.s32 %s117, 1
      %p121 = scmp.eq.s32.totalorder %s20, 1
      %p122 = scmp.ne.s32.totalorder %s117, %s119
      %p123 = scmp.eq.s32.totalorder %s20, 0
      %p124 = por %p122, %p123
      %p125 = scmp.ne.s32.totalorder %s117, %s119
      %p126 = scmp.eq.s32.totalorder %s25, 1
      %p127 = por %p125, %p126
      %p128 = scmp.ne.s32.totalorder %s119, %s120
      %p129 = scmp.eq.s32.totalorder %s25, 0
      %p130 = por %p128, %p129
      %p131 = scmp.ne.s32.totalorder %s119, %s120
      %p132 = scmp.eq.s32.totalorder %s26, 1
      %p133 = por %p131, %p132
      %p135 = scmp.ne.s32.totalorder %s120, %s134
      %p136 = scmp.eq.s32.totalorder %s26, 0
      %p137 = por %p135, %p136
      %s139 = sadd.s32 %s138, 1
      %p142 = scmp.eq.s32.totalorder %s20, 1
      %p143 = scmp.ne.s32.totalorder %s138, %s140
      %p144 = scmp.eq.s32.totalorder %s20, 0
      %p145 = por %p143, %p144
      %p146 = scmp.ne.s32.totalorder %s138, %s140
      %p147 = scmp.eq.s32.totalorder %s25, 1
      %p148 = por %p146, %p147
      %p149 = scmp.ne.s32.totalorder %s140, %s141
      %p150 = scmp.eq.s32.totalorder %s25, 0
      %p151 = por %p149, %p150
      %p152 = scmp.ne.s32.totalorder %s140, %s141
      %p153 = scmp.eq.s32.totalorder %s26, 1
      %p154 = por %p152, %p153
      %p156 = scmp.ne.s32.totalorder %s141, %s155
      %p157 = scmp.eq.s32.totalorder %s26, 0
      %p158 = por %p156, %p157
      %s160 = sadd.s32 %s159, 1
      %p163 = scmp.eq.s32.totalorder %s20, 1
      %p164 = scmp.ne.s32.totalorder %s159, %s161
      %p165 = scmp.eq.s32.totalorder %s20, 0
      %p166 = por %p164, %p165
      %p167 = scmp.ne.s32.totalorder %s159, %s161
      %p168 = scmp.eq.s32.totalorder %s25, 1
      %p169 = por %p167, %p168
      %p170 = scmp.ne.s32.totalorder %s161, %s162
      %p171 = scmp.eq.s32.totalorder %s25, 0
      %p172 = por %p170, %p171
      %p173 = scmp.ne.s32.totalorder %s161, %s162
      %p174 = scmp.eq.s32.totalorder %s26, 1
      %p175 = por %p173, %p174
      %p177 = scmp.ne.s32.totalorder %s162, %s176
      %p178 = scmp.eq.s32.totalorder %s26, 0
      %p179 = por %p177, %p178
      %s181 = sadd.s32 %s180, 1
      %p184 = scmp.eq.s32.totalorder %s20, 1
      %p185 = scmp.ne.s32.totalorder %s180, %s182
      %p186 = scmp.eq.s32.totalorder %s20, 0
      %p187 = por %p185, %p186
      %p188 = scmp.ne.s32.totalorder %s180, %s182
      %p189 = scmp.eq.s32.totalorder %s25, 1
      %p190 = por %p188, %p189
      %p191 = scmp.ne.s32.totalorder %s182, %s183
      %p192 = scmp.eq.s32.totalorder %s25, 0
      %p193 = por %p191, %p192
      %p194 = scmp.ne.s32.totalorder %s182, %s183
      %p195 = scmp.eq.s32.totalorder %s26, 1
      %p196 = por %p194, %p195
      %p198 = scmp.ne.s32.totalorder %s183, %s197
      %p199 = scmp.eq.s32.totalorder %s26, 0
      %p200 = por %p198, %p199
      %s202 = sadd.s32 %s201, 1
      %p205 = scmp.eq.s32.totalorder %s20, 1
      %p206 = scmp.ne.s32.totalorder %s201, %s203
      %p207 = scmp.eq.s32.totalorder %s20, 0
      %p208 = por %p206, %p207
      %p209 = scmp.ne.s32.totalorder %s201, %s203
      %p210 = scmp.eq.s32.totalorder %s25, 1
      %p211 = por %p209, %p210
      %p212 = scmp.ne.s32.totalorder %s203, %s204
      %p213 = scmp.eq.s32.totalorder %s25, 0
      %p214 = por %p212, %p213
      %p215 = scmp.ne.s32.totalorder %s203, %s204
      %p216 = scmp.eq.s32.totalorder %s26, 1
      %p217 = por %p215, %p216
      %p219 = scmp.ne.s32.totalorder %s204, %s218
      %p220 = scmp.eq.s32.totalorder %s26, 0
      %p221 = por %p219, %p220
      %s223 = sadd.s32 %s222, 1
      %p226 = scmp.eq.s32.totalorder %s20, 1
      %p227 = scmp.ne.s32.totalorder %s222, %s224
      %p228 = scmp.eq.s32.totalorder %s20, 0
      %p229 = por %p227, %p228
      %p230 = scmp.ne.s32.totalorder %s222, %s224
      %p231 = scmp.eq.s32.totalorder %s25, 1
      %p232 = por %p230, %p231
      %p233 = scmp.ne.s32.totalorder %s224, %s225
      %p234 = scmp.eq.s32.totalorder %s25, 0
      %p235 = por %p233, %p234
      %p236 = scmp.ne.s32.totalorder %s224, %s225
      %p237 = scmp.eq.s32.totalorder %s26, 1
      %p238 = por %p236, %p237
      %p240 = scmp.ne.s32.totalorder %s225, %s239
      %p241 = scmp.eq.s32.totalorder %s26, 0
      %p242 = por %p240, %p241
      %s243 = ssub.s32 %s20, %s27
      %p244 = scmp.eq.s32.totalorder %s243, 0
      %s246 = sadd.s32 %s245, 1
      %s247 = scalar_select %p244, %s245, %s246
      %p250 = pneg %p244
      %p251 = scmp.eq.s32.totalorder %s20, 1
      %p252 = por %p250, %p251
      %p253 = scmp.ne.s32.totalorder %s245, %s248
      %p254 = scmp.eq.s32.totalorder %s20, 0
      %p255 = por %p253, %p254
      %p256 = scmp.ne.s32.totalorder %s245, %s248
      %p257 = scmp.eq.s32.totalorder %s25, 1
      %p258 = por %p256, %p257
      %p259 = scmp.ne.s32.totalorder %s248, %s249
      %p260 = scmp.eq.s32.totalorder %s25, 0
      %p261 = por %p259, %p260
      %p262 = scmp.ne.s32.totalorder %s248, %s249
      %p263 = scmp.eq.s32.totalorder %s26, 1
      %p264 = por %p262, %p263
      %p266 = scmp.ne.s32.totalorder %s249, %s265
      %p267 = scmp.eq.s32.totalorder %s26, 0
      %p268 = por %p266, %p267
      %p269 = scmp.le.s32.totalorder 1, %s20
      %p270 = scmp.lt.s32.totalorder %s20, 3
      %p271 = pnand %p269, %p270
      %p272 = pneg %p271
      // Predicated region
      $region9: #{tpu_custom_call.1} parent=5 // pred_check
        _
      $region10: #{tpu_custom_call.1} parent=5 // pred_check_branch
        %274 = sbr.rel (%p271) target = $region12
      $region11: #{tpu_custom_call.1} parent=5 // pred_region
        %s275 = ssub.s32 %s20, 1
        // Predicated region
        $region13: #{tpu_custom_call.1} parent=11 // pred_check
          %p276 = pneg %p67
        $region14: #{tpu_custom_call.1} parent=11 // pred_check_branch
          %278 = sbr.rel (%p276) target = $region16
        $region15: #{tpu_custom_call.1} parent=11 // pred_region
          _
        $region16: #{tpu_custom_call.1} parent=11 // pred_fallthru
          _
        // Predicated region
        $region17: #{tpu_custom_call.1} parent=11 // pred_check
          %p279 = pneg %p88
        $region18: #{tpu_custom_call.1} parent=11 // pred_check_branch
          %281 = sbr.rel (%p279) target = $region20
        $region19: #{tpu_custom_call.1} parent=11 // pred_region
          _
        $region20: #{tpu_custom_call.1} parent=11 // pred_fallthru
          _
        // Predicated region
        $region21: #{tpu_custom_call.1} parent=11 // pred_check
          %p282 = pneg %p109
        $region22: #{tpu_custom_call.1} parent=11 // pred_check_branch
          %284 = sbr.rel (%p282) target = $region24
        $region23: #{tpu_custom_call.1} parent=11 // pred_region
          _
        $region24: #{tpu_custom_call.1} parent=11 // pred_fallthru
          _
        // Predicated region
        $region25: #{tpu_custom_call.1} parent=11 // pred_check
          %p285 = pneg %p130
        $region26: #{tpu_custom_call.1} parent=11 // pred_check_branch
          %287 = sbr.rel (%p285) target = $region28
        $region27: #{tpu_custom_call.1} parent=11 // pred_region
          _
        $region28: #{tpu_custom_call.1} parent=11 // pred_fallthru
          _
        // Predicated region
        $region29: #{tpu_custom_call.1} parent=11 // pred_check
          %p288 = pneg %p151
        $region30: #{tpu_custom_call.1} parent=11 // pred_check_branch
          %290 = sbr.rel (%p288) target = $region32
        $region31: #{tpu_custom_call.1} parent=11 // pred_region
          _
        $region32: #{tpu_custom_call.1} parent=11 // pred_fallthru
          _
        // Predicated region
        $region33: #{tpu_custom_call.1} parent=11 // pred_check
          %p291 = pneg %p172
        $region34: #{tpu_custom_call.1} parent=11 // pred_check_branch
          %293 = sbr.rel (%p291) target = $region36
        $region35: #{tpu_custom_call.1} parent=11 // pred_region
          _
        $region36: #{tpu_custom_call.1} parent=11 // pred_fallthru
          _
        // Predicated region
        $region37: #{tpu_custom_call.1} parent=11 // pred_check
          %p294 = pneg %p193
        $region38: #{tpu_custom_call.1} parent=11 // pred_check_branch
          %296 = sbr.rel (%p294) target = $region40
        $region39: #{tpu_custom_call.1} parent=11 // pred_region
          _
        $region40: #{tpu_custom_call.1} parent=11 // pred_fallthru
          _
        // Predicated region
        $region41: #{tpu_custom_call.1} parent=11 // pred_check
          %p297 = pneg %p214
        $region42: #{tpu_custom_call.1} parent=11 // pred_check_branch
          %299 = sbr.rel (%p297) target = $region44
        $region43: #{tpu_custom_call.1} parent=11 // pred_region
          _
        $region44: #{tpu_custom_call.1} parent=11 // pred_fallthru
          _
        // Predicated region
        $region45: #{tpu_custom_call.1} parent=11 // pred_check
          %p300 = pneg %p235
        $region46: #{tpu_custom_call.1} parent=11 // pred_check_branch
          %302 = sbr.rel (%p300) target = $region48
        $region47: #{tpu_custom_call.1} parent=11 // pred_region
          %s304 = ssub.s32 16, 16
          %305 = vsyncadd [#allocation4], %s304
          %s307 = sshll.u32 %s9, 4
          %s308 = int_to_ptr.vmem [resolvable:$true] %s307
          %310 = dma.vmem_to_smem %s308, 16, [#allocation2], [#allocation4]
        $region48: #{tpu_custom_call.1} parent=11 // pred_fallthru
          _
      $region12: #{tpu_custom_call.1} parent=5 // pred_fallthru
        _
      %p311 = scmp.lt.s32.totalorder %s20, 2
      // Predicated region
      $region49: #{tpu_custom_call.1} parent=5 // pred_check
        %p312 = pneg %p311
      $region50: #{tpu_custom_call.1} parent=5 // pred_check_branch
        %314 = sbr.rel (%p312) target = $region52
      $region51: #{tpu_custom_call.1} parent=5 // pred_region
        // Predicated region
        $region53: #{tpu_custom_call.1} parent=51 // pred_check
          %p315 = pneg %p40
        $region54: #{tpu_custom_call.1} parent=51 // pred_check_branch
          %317 = sbr.rel (%p315) target = $region56
        $region55: #{tpu_custom_call.1} parent=51 // pred_region
          %p318 = scmp.lt.s32.totalorder %s20, 1
          %s319 = scalar_select %p318, %s20, 1
          %s320 = smul.addr %s319, 2
          %s321 = smul.addr %s320, 4
          %s322 = scalar_lea.vmem %s0, %s321
        $region56: #{tpu_custom_call.1} parent=51 // pred_fallthru
          _
      $region52: #{tpu_custom_call.1} parent=5 // pred_fallthru
        _
      %p323 = scmp.le.s32.totalorder 1, %s20
      %p324 = scmp.lt.s32.totalorder %s20, 3
      %p325 = pnand %p323, %p324
      %p326 = pneg %p325
      // Predicated region
      $region57: #{tpu_custom_call.1} parent=5 // pred_check
        _
      $region58: #{tpu_custom_call.1} parent=5 // pred_check_branch
        %328 = sbr.rel (%p325) target = $region60
      $region59: #{tpu_custom_call.1} parent=5 // pred_region
        %s329 = ssub.s32 %s20, 1
        // Predicated region
        $region61: #{tpu_custom_call.1} parent=59 // pred_check
          %p330 = pneg %p235
        $region62: #{tpu_custom_call.1} parent=59 // pred_check_branch
          %332 = sbr.rel (%p330) target = $region64
        $region63: #{tpu_custom_call.1} parent=59 // pred_region
          %333 = dma.done [#allocation4], 16
        $region64: #{tpu_custom_call.1} parent=59 // pred_fallthru
          _
        %334 = sfence
        %p335 = scmp.lt.s32.totalorder %s25, 1
        %s336 = scalar_select %p335, %s25, 1
        %s337 = smul.addr %s336, 2
        %s338 = smul.addr %s337, 4
        %s339 = scalar_lea.vmem %s0, %s338
        %p340 = pneg %p46
        %p341 = pneg %p43
        %p342 = pneg %p67
        %p343 = pneg %p64
        %p344 = pneg %p88
        %p345 = pneg %p85
        %p346 = pneg %p109
        %p347 = pneg %p106
        %p348 = pneg %p130
        %p349 = pneg %p127
        %p350 = pneg %p151
        %p351 = pneg %p148
        %p352 = pneg %p172
        %p353 = pneg %p169
        %p354 = pneg %p193
        %p355 = pneg %p190
        %p356 = pneg %p214
        %p357 = pneg %p211
        %p358 = pneg %p235
        %p359 = pneg %p232
        %p360 = pneg %p261
        %p361 = pneg %p258
        %s362 = sand.u32 %s248, 1
        %s363 = scalar_lea.sflag [#allocation3], %s362
        %s364 = sand.u32 %s248, 1
        %s365 = smul.addr %s364, 8
        %s366 = scalar_lea.vmem [#allocation5], %s365
        %p367 = scmp.lt.s32.totalorder %s25, 1
        %s368 = scalar_select %p367, %s25, 1
        %s369 = smul.addr %s368, 2
        %s370 = smul.addr %s369, 4
        %s371 = scalar_lea.vmem %s0, %s370
        %v372 = vld [vmem:[%s371] sm:$0xff]
        %v374 = vcombine.high %v372, %v372
        %vm376 = vcmask 1043456
        %v377 = vsel %vm376, %v372, 0.0
        %v378 = vsel %vm376, %v374, 0.0
        %v379 = vadd.f32 %v377, %v378
        %380 = vadd.xlane.f32.xlu0 %v379
        %v381 = vpop.xlane.xlu0 %380
        %v382 = vrcp.pop 256.0
        %v383 = vmul.f32 %v381, %v382
        %v384 = vsel %vm376, %v372, -inf
        %v385 = vsel %vm376, %v374, -inf
        %v386 = vmax.f32 %v384, %v385
        %387 = vmax.xlane.f32.xlu0 %v386
        %v388 = vpop.xlane.xlu0 %387
        %v389 = vld [vmem:[%s2] sm:$0xf]
        %v390 = vmul.f32 %v383, %v389
        %vm391 = vcmask 11264
        %v392 = vsel %vm391, %v390, 0.0
        %v393 = vrot.slane %v392, 4
        %v394 = vadd.f32 %v392, %v393
        %v395 = vrot.slane %v394, 2
        %v396 = vadd.f32 %v394, %v395
        %v397 = vrot.slane %v396, 1
        %v398 = vadd.f32 %v396, %v397
        %v399 = vld [vmem:[%s3] sm:$0x1]
        %v400 = vadd.f32 %v398, %v399
        %v401 = vmax.f32 %v400, 0.0
        %v402 = vld [vmem:[%s4] sm:$0xf]
        %v403 = vlaneseq
        %v404 = vshrl.u32 %v403, 7
        %v405 = vsub.s32 0, %v404
        %v406 = vrot.slane %v401, %v405
        %v407 = vmul.f32 %v406, %v402
        %v408 = vsel %vm391, %v407, 0.0
        %409 = vadd.xlane.f32.xlu0 %v408
        %v410 = vpop.xlane.xlu0 %409
        %s411 = scalar_lea.vmem %s2, 4
        %v412 = vld [vmem:[%s411] sm:$0xf]
        %v413 = vmul.f32 %v388, %v412
        %v414 = vsel %vm391, %v413, 0.0
        %v415 = vrot.slane %v414, 4
        %v416 = vadd.f32 %v414, %v415
        %v417 = vrot.slane %v416, 2
        %v418 = vadd.f32 %v416, %v417
        %v419 = vrot.slane %v418, 1
        %v420 = vadd.f32 %v418, %v419
        %s421 = scalar_lea.vmem %s3, 1
        %v422 = vld [vmem:[%s421] sm:$0x1]
        %v423 = vadd.f32 %v420, %v422
        %v424 = vmax.f32 %v423, 0.0
        %s425 = scalar_lea.vmem %s4, 4
        %v426 = vld [vmem:[%s425] sm:$0xf]
        %v427 = vlaneseq
        %v428 = vshrl.u32 %v427, 7
        %v429 = vsub.s32 0, %v428
        %v430 = vrot.slane %v424, %v429
        %v431 = vmul.f32 %v430, %v426
        %v432 = vsel %vm391, %v431, 0.0
        %433 = vadd.xlane.f32.xlu0 %v432
        %v434 = vpop.xlane.xlu0 %433
        %v435 = vadd.f32 %v410, %v434
        %v436 = vld [vmem:[%s5] sm:$0xf]
        %v437 = vadd.f32 %v435, %v436
        %v438 = vxor.u32 %v437, 2147483648
        %v439 = vmul.f32 %v438, 1.442695
        %v440 = vpow.pop %v439
        %v441 = vadd.f32 %v440, 1.0
        %v442 = vrcp.pop %v441
        %v443 = vmul.f32 1.0, %v442
        %445 = vset.pattern.permute.xlu0 0
        %446 = vperm.xlu0 %445, %v443
        %v447 = vpop.permute.xlu0 %446
        %v449 = vunpack.c.l.s4 839922192
        %v450 = vunpack.c.0.s8 %v449
        %v451 = vlaneseq
        %v452 = vshrl.u32 %v451, 7
        %v453 = vsub.s32 %v450, %v452
        %v454 = vrot.slane %v447, %v453
        %v456 = vmul.f32 %v372, %v454
        %v458 = vcombine.high %v456, %v456
        %v460 = vsel %vm376, %v456, -inf
        %v461 = vrot.slane %v460, 4
        %v462 = vmax.f32 %v460, %v461
        %v463 = vrot.slane %v462, 2
        %v464 = vmax.f32 %v462, %v463
        %v465 = vrot.slane %v464, 1
        %v466 = vmax.f32 %v464, %v465
        %v467 = vsel %vm376, %v458, -inf
        %v468 = vrot.slane %v467, 4
        %v469 = vmax.f32 %v467, %v468
        %v470 = vrot.slane %v469, 2
        %v471 = vmax.f32 %v469, %v470
        %v472 = vrot.slane %v471, 1
        %v473 = vmax.f32 %v471, %v472
        %v474 = vsel %vm376, %v456, 0.0
        %v475 = vrot.slane %v474, 4
        %v476 = vadd.f32 %v474, %v475
        %v477 = vrot.slane %v476, 2
        %v478 = vadd.f32 %v476, %v477
        %v479 = vrot.slane %v478, 1
        %v480 = vadd.f32 %v478, %v479
        %v481 = vsel %vm376, %v458, 0.0
        %v482 = vrot.slane %v481, 4
        %v483 = vadd.f32 %v481, %v482
        %v484 = vrot.slane %v483, 2
        %v485 = vadd.f32 %v483, %v484
        %v486 = vrot.slane %v485, 1
        %v487 = vadd.f32 %v485, %v486
        %v488 = vrcp.pop 4.0
        %v489 = vmul.f32 %v480, %v488
        %v490 = vmul.f32 %v487, %v488
        %s491 = sld [smem:[#allocation2]]
        %v492 = vstv %s491
        %v493 = vmul.f32 %v466, %v492
        %v494 = vmul.f32 %v473, %v492
        %s495 = sld [smem:[#allocation2 + $0x9]]
        %v496 = vstv %s495
        %v497 = vmul.f32 %v489, %v496
        %v498 = vmul.f32 %v490, %v496
        %v499 = vadd.f32 %v493, %v497
        %v500 = vadd.f32 %v494, %v498
        %502 = vrot.lane.b32.xlu0 %v500, 17
        %v503 = vpop.permute.xlu0 %502
        %506 = vrot.lane.b32.xlu0 %v499, 17
        %v507 = vpop.permute.xlu0 %506
        %vm508 = vcmask 138240
        %v509 = vsel %vm508, %v507, %v503
        %v512 = vsel %vm508, %v503, %v507
        %v513 = vld [vmem:[%s1] sm:$0x3]
        %v515 = vlaneseq
        %v516 = vshrl.u32 %v515, 7
        %v517 = vsub.s32 0, %v516
        %v518 = vrot.slane %v513, %v517
        %v519 = vlaneseq
        %v520 = vshrl.u32 %v519, 7
        %v521 = vsub.s32 1, %v520
        %v522 = vrot.slane %v513, %v521
        %v525 = vmul.f32 %v512, %v518
        %v526 = vmul.f32 %v509, %v522
        %v527 = vadd.f32 %v525, 0.0
        %v528 = vadd.f32 %v526, 0.0
        %s529 = sld [smem:[#allocation2 + $0x1]]
        %v530 = vstv %s529
        %v531 = vmul.f32 %v466, %v530
        %v532 = vmul.f32 %v473, %v530
        %s533 = sld [smem:[#allocation2 + $0xa]]
        %v534 = vstv %s533
        %v535 = vmul.f32 %v489, %v534
        %v536 = vmul.f32 %v490, %v534
        %v537 = vadd.f32 %v531, %v535
        %v538 = vadd.f32 %v532, %v536
        %540 = vrot.lane.b32.xlu0 %v538, 16
        %v541 = vpop.permute.xlu0 %540
        %544 = vrot.lane.b32.xlu0 %v537, 16
        %v545 = vpop.permute.xlu0 %544
        %vm546 = vcmask 130048
        %v547 = vsel %vm546, %v545, %v541
        %v550 = vsel %vm546, %v541, %v545
        %s551 = scalar_lea.vmem %s1, 2
        %v552 = vld [vmem:[%s551] sm:$0x3]
        %v554 = vlaneseq
        %v555 = vshrl.u32 %v554, 7
        %v556 = vsub.s32 0, %v555
        %v557 = vrot.slane %v552, %v556
        %v558 = vlaneseq
        %v559 = vshrl.u32 %v558, 7
        %v560 = vsub.s32 1, %v559
        %v561 = vrot.slane %v552, %v560
        %v564 = vmul.f32 %v550, %v557
        %v565 = vmul.f32 %v547, %v561
        %v566 = vadd.f32 %v527, %v564
        %v567 = vadd.f32 %v528, %v565
        %s568 = sld [smem:[#allocation2 + $0x2]]
        %v569 = vstv %s568
        %v570 = vmul.f32 %v466, %v569
        %v571 = vmul.f32 %v473, %v569
        %s572 = sld [smem:[#allocation2 + $0xb]]
        %v573 = vstv %s572
        %v574 = vmul.f32 %v489, %v573
        %v575 = vmul.f32 %v490, %v573
        %v576 = vadd.f32 %v570, %v574
        %v577 = vadd.f32 %v571, %v575
        %579 = vrot.lane.b32.xlu0 %v577, 15
        %v580 = vpop.permute.xlu0 %579
        %583 = vrot.lane.b32.xlu0 %v576, 15
        %v584 = vpop.permute.xlu0 %583
        %vm585 = vcmask 121856
        %v586 = vsel %vm585, %v584, %v580
        %v589 = vsel %vm585, %v580, %v584
        %s590 = scalar_lea.vmem %s1, 4
        %v591 = vld [vmem:[%s590] sm:$0x3]
        %v593 = vlaneseq
        %v594 = vshrl.u32 %v593, 7
        %v595 = vsub.s32 0, %v594
        %v596 = vrot.slane %v591, %v595
        %v597 = vlaneseq
        %v598 = vshrl.u32 %v597, 7
        %v599 = vsub.s32 1, %v598
        %v600 = vrot.slane %v591, %v599
        %v603 = vmul.f32 %v589, %v596
        %v604 = vmul.f32 %v586, %v600
        %v605 = vadd.f32 %v566, %v603
        %v606 = vadd.f32 %v567, %v604
        %s607 = sld [smem:[#allocation2 + $0x3]]
        %v608 = vstv %s607
        %v609 = vmul.f32 %v466, %v608
        %v610 = vmul.f32 %v473, %v608
        %s611 = sld [smem:[#allocation2 + $0xc]]
        %v612 = vstv %s611
        %v613 = vmul.f32 %v489, %v612
        %v614 = vmul.f32 %v490, %v612
        %v615 = vadd.f32 %v609, %v613
        %v616 = vadd.f32 %v610, %v614
        %618 = vrot.lane.b32.xlu0 %v616, 1
        %v619 = vpop.permute.xlu0 %618
        %622 = vrot.lane.b32.xlu0 %v615, 1
        %v623 = vpop.permute.xlu0 %622
        %vm624 = vcmask 7168
        %v625 = vsel %vm624, %v623, %v619
        %v628 = vsel %vm624, %v619, %v623
        %s629 = scalar_lea.vmem %s1, 6
        %v630 = vld [vmem:[%s629] sm:$0x3]
        %v632 = vlaneseq
        %v633 = vshrl.u32 %v632, 7
        %v634 = vsub.s32 0, %v633
        %v635 = vrot.slane %v630, %v634
        %v636 = vlaneseq
        %v637 = vshrl.u32 %v636, 7
        %v638 = vsub.s32 1, %v637
        %v639 = vrot.slane %v630, %v638
        %v642 = vmul.f32 %v628, %v635
        %v643 = vmul.f32 %v625, %v639
        %v644 = vadd.f32 %v605, %v642
        %v645 = vadd.f32 %v606, %v643
        %s646 = sld [smem:[#allocation2 + $0x4]]
        %v647 = vstv %s646
        %v648 = vmul.f32 %v466, %v647
        %v649 = vmul.f32 %v473, %v647
        %s650 = sld [smem:[#allocation2 + $0xd]]
        %v651 = vstv %s650
        %v652 = vmul.f32 %v489, %v651
        %v653 = vmul.f32 %v490, %v651
        %v654 = vadd.f32 %v648, %v652
        %v655 = vadd.f32 %v649, %v653
        %v656 = vadd.f32 %v644, %v654
        %v657 = vadd.f32 %v645, %v655
        %s658 = sld [smem:[#allocation2 + $0x5]]
        %v659 = vstv %s658
        %v660 = vmul.f32 %v466, %v659
        %v661 = vmul.f32 %v473, %v659
        %s662 = sld [smem:[#allocation2 + $0xe]]
        %v663 = vstv %s662
        %v664 = vmul.f32 %v489, %v663
        %v665 = vmul.f32 %v490, %v663
        %v666 = vadd.f32 %v660, %v664
        %v667 = vadd.f32 %v661, %v665
        %670 = vrot.lane.b32.xlu0 %v666, 127
        %v671 = vpop.permute.xlu0 %670
        %672 = vrot.lane.b32.xlu0 %v667, 127
        %v673 = vpop.permute.xlu0 %672
        %vm674 = vcmask 1039360
        %v675 = vsel %vm674, %v671, %v673
        %v679 = vsel %vm674, %v673, %v671
        %s680 = scalar_lea.vmem %s1, 10
        %v681 = vld [vmem:[%s680] sm:$0x3]
        %v683 = vlaneseq
        %v684 = vshrl.u32 %v683, 7
        %v685 = vsub.s32 0, %v684
        %v686 = vrot.slane %v681, %v685
        %v687 = vlaneseq
        %v688 = vshrl.u32 %v687, 7
        %v689 = vsub.s32 1, %v688
        %v690 = vrot.slane %v681, %v689
        %v693 = vmul.f32 %v675, %v686
        %v694 = vmul.f32 %v679, %v690
        %v695 = vadd.f32 %v656, %v693
        %v696 = vadd.f32 %v657, %v694
        %s697 = sld [smem:[#allocation2 + $0x6]]
        %v698 = vstv %s697
        %v699 = vmul.f32 %v466, %v698
        %v700 = vmul.f32 %v473, %v698
        %s701 = sld [smem:[#allocation2 + $0xf]]
        %v702 = vstv %s701
        %v703 = vmul.f32 %v489, %v702
        %v704 = vmul.f32 %v490, %v702
        %v705 = vadd.f32 %v699, %v703
        %v706 = vadd.f32 %v700, %v704
        %709 = vrot.lane.b32.xlu0 %v705, 113
        %v710 = vpop.permute.xlu0 %709
        %711 = vrot.lane.b32.xlu0 %v706, 113
        %v712 = vpop.permute.xlu0 %711
        %vm713 = vcmask 924672
        %v714 = vsel %vm713, %v710, %v712
        %v718 = vsel %vm713, %v712, %v710
        %s719 = scalar_lea.vmem %s1, 12
        %v720 = vld [vmem:[%s719] sm:$0x3]
        %v722 = vlaneseq
        %v723 = vshrl.u32 %v722, 7
        %v724 = vsub.s32 0, %v723
        %v725 = vrot.slane %v720, %v724
        %v726 = vlaneseq
        %v727 = vshrl.u32 %v726, 7
        %v728 = vsub.s32 1, %v727
        %v729 = vrot.slane %v720, %v728
        %v732 = vmul.f32 %v714, %v725
        %v733 = vmul.f32 %v718, %v729
        %v734 = vadd.f32 %v695, %v732
        %v735 = vadd.f32 %v696, %v733
        %s736 = sld [smem:[#allocation2 + $0x7]]
        %v737 = vstv %s736
        %v738 = vmul.f32 %v466, %v737
        %v739 = vmul.f32 %v473, %v737
        %s740 = sld [smem:[#allocation2 + $0x10]]
        %v741 = vstv %s740
        %v742 = vmul.f32 %v489, %v741
        %v743 = vmul.f32 %v490, %v741
        %v744 = vadd.f32 %v738, %v742
        %v745 = vadd.f32 %v739, %v743
        %748 = vrot.lane.b32.xlu0 %v744, 112
        %v749 = vpop.permute.xlu0 %748
        %750 = vrot.lane.b32.xlu0 %v745, 112
        %v751 = vpop.permute.xlu0 %750
        %vm752 = vcmask 916480
        %v753 = vsel %vm752, %v749, %v751
        %v757 = vsel %vm752, %v751, %v749
        %s758 = scalar_lea.vmem %s1, 14
        %v759 = vld [vmem:[%s758] sm:$0x3]
        %v761 = vlaneseq
        %v762 = vshrl.u32 %v761, 7
        %v763 = vsub.s32 0, %v762
        %v764 = vrot.slane %v759, %v763
        %v765 = vlaneseq
        %v766 = vshrl.u32 %v765, 7
        %v767 = vsub.s32 1, %v766
        %v768 = vrot.slane %v759, %v767
        %v771 = vmul.f32 %v753, %v764
        %v772 = vmul.f32 %v757, %v768
        %v773 = vadd.f32 %v734, %v771
        %v774 = vadd.f32 %v735, %v772
        %s775 = sld [smem:[#allocation2 + $0x8]]
        %v776 = vstv %s775
        %v777 = vmul.f32 %v466, %v776
        %v778 = vmul.f32 %v473, %v776
        %s779 = sld [smem:[#allocation2 + $0x11]]
        %v780 = vstv %s779
        %v781 = vmul.f32 %v489, %v780
        %v782 = vmul.f32 %v490, %v780
        %v783 = vadd.f32 %v777, %v781
        %v784 = vadd.f32 %v778, %v782
        %787 = vrot.lane.b32.xlu0 %v783, 111
        %v788 = vpop.permute.xlu0 %787
        %789 = vrot.lane.b32.xlu0 %v784, 111
        %v790 = vpop.permute.xlu0 %789
        %vm791 = vcmask 908288
        %v792 = vsel %vm791, %v788, %v790
        %v796 = vsel %vm791, %v790, %v788
        %s797 = scalar_lea.vmem %s1, 16
        %v798 = vld [vmem:[%s797] sm:$0x3]
        %v800 = vlaneseq
        %v801 = vshrl.u32 %v800, 7
        %v802 = vsub.s32 0, %v801
        %v803 = vrot.slane %v798, %v802
        %v804 = vlaneseq
        %v805 = vshrl.u32 %v804, 7
        %v806 = vsub.s32 1, %v805
        %v807 = vrot.slane %v798, %v806
        %v810 = vmul.f32 %v792, %v803
        %v811 = vmul.f32 %v796, %v807
        %v812 = vadd.f32 %v773, %v810
        %v813 = vadd.f32 %v774, %v811
        %s814 = sld [smem:[#allocation2 + $0x12]]
        %v815 = vstv %s814
        %v816 = vadd.f32 %v812, %v815
        %v817 = vadd.f32 %v813, %v815
        %v818 = vxor.u32 %v816, 2147483648
        %v819 = vxor.u32 %v817, 2147483648
        %v820 = vmul.f32 %v818, 1.442695
        %v821 = vpow.pop %v820
        %v822 = vmul.f32 %v819, 1.442695
        %v823 = vpow.pop %v822
        %v824 = vadd.f32 %v821, 1.0
        %v825 = vadd.f32 %v823, 1.0
        %v826 = vrcp.pop %v824
        %v827 = vmul.f32 1.0, %v826
        %v828 = vrcp.pop %v825
        %v829 = vmul.f32 1.0, %v828
        %v830 = vlaneseq
        %v831 = vshrl.u32 %v830, 7
        %v832 = vsub.s32 0, %v831
        %v833 = vrot.slane %v827, %v832
        %v834 = vlaneseq
        %v835 = vshrl.u32 %v834, 7
        %v836 = vsub.s32 0, %v835
        %v837 = vrot.slane %v829, %v836
        %v838 = vmul.f32 %v833, %v456
        %v839 = vmul.f32 %v837, %v458
        %v840 = vld [vmem:[%s6] sm:$0x3]
        %v841 = vlaneseq
        %v842 = vshrl.u32 %v841, 7
        %v843 = vsub.s32 0, %v842
        %v844 = vrot.slane %v372, %v843
        %v845 = vlaneseq
        %v846 = vshrl.u32 %v845, 7
        %v847 = vsub.s32 4, %v846
        %v848 = vrot.slane %v372, %v847
        %v851 = vlaneseq
        %v852 = vshrl.u32 %v851, 7
        %v853 = vsub.s32 0, %v852
        %v854 = vrot.slane %v844, %v853
        %v855 = vlaneseq
        %v856 = vshrl.u32 %v855, 7
        %v857 = vsub.s32 0, %v856
        %v858 = vrot.slane %v848, %v857
        %860 = vset.pattern.permute.xlu0 0
        %861 = vperm.xlu0 %860, %v840
        %v862 = vpop.permute.xlu0 %861
        %v864 = vmul.f32 %v854, %v862
        %v865 = vmul.f32 %v858, %v862
        %s866 = scalar_lea.vmem %s6, 2
        %v867 = vld [vmem:[%s866] sm:$0x3]
        %v868 = vlaneseq
        %v869 = vshrl.u32 %v868, 7
        %v870 = vsub.s32 1, %v869
        %v871 = vrot.slane %v372, %v870
        %v872 = vlaneseq
        %v873 = vshrl.u32 %v872, 7
        %v874 = vsub.s32 5, %v873
        %v875 = vrot.slane %v372, %v874
        %v878 = vlaneseq
        %v879 = vshrl.u32 %v878, 7
        %v880 = vsub.s32 1, %v879
        %v881 = vrot.slane %v871, %v880
        %v882 = vlaneseq
        %v883 = vshrl.u32 %v882, 7
        %v884 = vsub.s32 1, %v883
        %v885 = vrot.slane %v875, %v884
        %887 = vset.pattern.permute.xlu0 0
        %888 = vperm.xlu0 %887, %v867
        %v889 = vpop.permute.xlu0 %888
        %v891 = vmul.f32 %v881, %v889
        %v892 = vmul.f32 %v885, %v889
        %v893 = vadd.f32 %v864, %v891
        %v894 = vadd.f32 %v865, %v892
        %s895 = scalar_lea.vmem %s6, 4
        %v896 = vld [vmem:[%s895] sm:$0x3]
        %v897 = vlaneseq
        %v898 = vshrl.u32 %v897, 7
        %v899 = vsub.s32 2, %v898
        %v900 = vrot.slane %v372, %v899
        %v901 = vlaneseq
        %v902 = vshrl.u32 %v901, 7
        %v903 = vsub.s32 6, %v902
        %v904 = vrot.slane %v372, %v903
        %v907 = vlaneseq
        %v908 = vshrl.u32 %v907, 7
        %v909 = vsub.s32 2, %v908
        %v910 = vrot.slane %v900, %v909
        %v911 = vlaneseq
        %v912 = vshrl.u32 %v911, 7
        %v913 = vsub.s32 2, %v912
        %v914 = vrot.slane %v904, %v913
        %916 = vset.pattern.permute.xlu0 0
        %917 = vperm.xlu0 %916, %v896
        %v918 = vpop.permute.xlu0 %917
        %v920 = vmul.f32 %v910, %v918
        %v921 = vmul.f32 %v914, %v918
        %v922 = vadd.f32 %v893, %v920
        %v923 = vadd.f32 %v894, %v921
        %s924 = scalar_lea.vmem %s6, 6
        %v925 = vld [vmem:[%s924] sm:$0x3]
        %v926 = vlaneseq
        %v927 = vshrl.u32 %v926, 7
        %v928 = vsub.s32 3, %v927
        %v929 = vrot.slane %v372, %v928
        %v930 = vlaneseq
        %v931 = vshrl.u32 %v930, 7
        %v932 = vsub.s32 7, %v931
        %v933 = vrot.slane %v372, %v932
        %v936 = vlaneseq
        %v937 = vshrl.u32 %v936, 7
        %v938 = vsub.s32 3, %v937
        %v939 = vrot.slane %v929, %v938
        %v940 = vlaneseq
        %v941 = vshrl.u32 %v940, 7
        %v942 = vsub.s32 3, %v941
        %v943 = vrot.slane %v933, %v942
        %945 = vset.pattern.permute.xlu0 0
        %946 = vperm.xlu0 %945, %v925
        %v947 = vpop.permute.xlu0 %946
        %v949 = vmul.f32 %v939, %v947
        %v950 = vmul.f32 %v943, %v947
        %v951 = vadd.f32 %v922, %v949
        %v952 = vadd.f32 %v923, %v950
        %v953 = vld [vmem:[%s8] sm:$0x3]
        %955 = vset.pattern.permute.xlu0 0
        %956 = vperm.xlu0 %955, %v953
        %v957 = vpop.permute.xlu0 %956
        %v959 = vmul.f32 %v951, %v957
        %v960 = vmul.f32 %v952, %v957
        %s961 = scalar_lea.vmem %s8, 2
        %v962 = vld [vmem:[%s961] sm:$0x3]
        %964 = vset.pattern.permute.xlu0 0
        %965 = vperm.xlu0 %964, %v962
        %v966 = vpop.permute.xlu0 %965
        %v968 = vadd.f32 %v959, %v966
        %v969 = vadd.f32 %v960, %v966
        %v970 = vmax.f32 %v968, 0.0
        %v971 = vmax.f32 %v969, 0.0
        %973 = vrot.lane.b32.xlu0 %v971, 17
        %v974 = vpop.permute.xlu0 %973
        %977 = vrot.lane.b32.xlu0 %v970, 17
        %v978 = vpop.permute.xlu0 %977
        %v979 = vsel %vm508, %v978, %v974
        %v982 = vsel %vm508, %v974, %v978
        %v983 = vmul.f32 %v982, %v518
        %v984 = vmul.f32 %v979, %v522
        %v985 = vld [vmem:[%s7] sm:$0x3]
        %987 = vset.pattern.permute.xlu0 0
        %988 = vperm.xlu0 %987, %v985
        %v989 = vpop.permute.xlu0 %988
        %v991 = vmul.f32 %v983, %v989
        %v992 = vmul.f32 %v984, %v989
        %v993 = vadd.f32 %v991, 0.0
        %v994 = vadd.f32 %v992, 0.0
        %995 = vrot.lane.b32.xlu0 %v971, 16
        %v996 = vpop.permute.xlu0 %995
        %998 = vrot.lane.b32.xlu0 %v970, 16
        %v999 = vpop.permute.xlu0 %998
        %v1000 = vsel %vm546, %v999, %v996
        %v1003 = vsel %vm546, %v996, %v999
        %v1004 = vmul.f32 %v1003, %v557
        %v1005 = vmul.f32 %v1000, %v561
        %s1006 = scalar_lea.vmem %s7, 2
        %v1007 = vld [vmem:[%s1006] sm:$0x3]
        %1009 = vset.pattern.permute.xlu0 0
        %1010 = vperm.xlu0 %1009, %v1007
        %v1011 = vpop.permute.xlu0 %1010
        %v1013 = vmul.f32 %v1004, %v1011
        %v1014 = vmul.f32 %v1005, %v1011
        %v1015 = vadd.f32 %v993, %v1013
        %v1016 = vadd.f32 %v994, %v1014
        %1017 = vrot.lane.b32.xlu0 %v971, 15
        %v1018 = vpop.permute.xlu0 %1017
        %1020 = vrot.lane.b32.xlu0 %v970, 15
        %v1021 = vpop.permute.xlu0 %1020
        %v1022 = vsel %vm585, %v1021, %v1018
        %v1025 = vsel %vm585, %v1018, %v1021
        %v1026 = vmul.f32 %v1025, %v596
        %v1027 = vmul.f32 %v1022, %v600
        %s1028 = scalar_lea.vmem %s7, 4
        %v1029 = vld [vmem:[%s1028] sm:$0x3]
        %1031 = vset.pattern.permute.xlu0 0
        %1032 = vperm.xlu0 %1031, %v1029
        %v1033 = vpop.permute.xlu0 %1032
        %v1035 = vmul.f32 %v1026, %v1033
        %v1036 = vmul.f32 %v1027, %v1033
        %v1037 = vadd.f32 %v1015, %v1035
        %v1038 = vadd.f32 %v1016, %v1036
        %1039 = vrot.lane.b32.xlu0 %v971, 1
        %v1040 = vpop.permute.xlu0 %1039
        %1042 = vrot.lane.b32.xlu0 %v970, 1
        %v1043 = vpop.permute.xlu0 %1042
        %v1044 = vsel %vm624, %v1043, %v1040
        %v1047 = vsel %vm624, %v1040, %v1043
        %v1048 = vmul.f32 %v1047, %v635
        %v1049 = vmul.f32 %v1044, %v639
        %s1050 = scalar_lea.vmem %s7, 6
        %v1051 = vld [vmem:[%s1050] sm:$0x3]
        %1053 = vset.pattern.permute.xlu0 0
        %1054 = vperm.xlu0 %1053, %v1051
        %v1055 = vpop.permute.xlu0 %1054
        %v1057 = vmul.f32 %v1048, %v1055
        %v1058 = vmul.f32 %v1049, %v1055
        %v1059 = vadd.f32 %v1037, %v1057
        %v1060 = vadd.f32 %v1038, %v1058
        %s1061 = scalar_lea.vmem %s7, 8
        %v1062 = vld [vmem:[%s1061] sm:$0x3]
        %1064 = vset.pattern.permute.xlu0 0
        %1065 = vperm.xlu0 %1064, %v1062
        %v1066 = vpop.permute.xlu0 %1065
        %v1068 = vmul.f32 %v970, %v1066
        %v1069 = vmul.f32 %v971, %v1066
        %v1070 = vadd.f32 %v1059, %v1068
        %v1071 = vadd.f32 %v1060, %v1069
        %1072 = vrot.lane.b32.xlu0 %v970, 127
        %v1073 = vpop.permute.xlu0 %1072
        %1074 = vrot.lane.b32.xlu0 %v971, 127
        %v1075 = vpop.permute.xlu0 %1074
        %v1076 = vsel %vm674, %v1073, %v1075
        %v1080 = vsel %vm674, %v1075, %v1073
        %v1081 = vmul.f32 %v1076, %v686
        %v1082 = vmul.f32 %v1080, %v690
        %s1083 = scalar_lea.vmem %s7, 10
        %v1084 = vld [vmem:[%s1083] sm:$0x3]
        %1086 = vset.pattern.permute.xlu0 0
        %1087 = vperm.xlu0 %1086, %v1084
        %v1088 = vpop.permute.xlu0 %1087
        %v1090 = vmul.f32 %v1081, %v1088
        %v1091 = vmul.f32 %v1082, %v1088
        %v1092 = vadd.f32 %v1070, %v1090
        %v1093 = vadd.f32 %v1071, %v1091
        %1094 = vrot.lane.b32.xlu0 %v970, 113
        %v1095 = vpop.permute.xlu0 %1094
        %1096 = vrot.lane.b32.xlu0 %v971, 113
        %v1097 = vpop.permute.xlu0 %1096
        %v1098 = vsel %vm713, %v1095, %v1097
        %v1102 = vsel %vm713, %v1097, %v1095
        %v1103 = vmul.f32 %v1098, %v725
        %v1104 = vmul.f32 %v1102, %v729
        %s1105 = scalar_lea.vmem %s7, 12
        %v1106 = vld [vmem:[%s1105] sm:$0x3]
        %1108 = vset.pattern.permute.xlu0 0
        %1109 = vperm.xlu0 %1108, %v1106
        %v1110 = vpop.permute.xlu0 %1109
        %v1112 = vmul.f32 %v1103, %v1110
        %v1113 = vmul.f32 %v1104, %v1110
        %v1114 = vadd.f32 %v1092, %v1112
        %v1115 = vadd.f32 %v1093, %v1113
        %1116 = vrot.lane.b32.xlu0 %v970, 112
        %v1117 = vpop.permute.xlu0 %1116
        %1118 = vrot.lane.b32.xlu0 %v971, 112
        %v1119 = vpop.permute.xlu0 %1118
        %v1120 = vsel %vm752, %v1117, %v1119
        %v1124 = vsel %vm752, %v1119, %v1117
        %v1125 = vmul.f32 %v1120, %v764
        %v1126 = vmul.f32 %v1124, %v768
        %s1127 = scalar_lea.vmem %s7, 14
        %v1128 = vld [vmem:[%s1127] sm:$0x3]
        %1130 = vset.pattern.permute.xlu0 0
        %1131 = vperm.xlu0 %1130, %v1128
        %v1132 = vpop.permute.xlu0 %1131
        %v1134 = vmul.f32 %v1125, %v1132
        %v1135 = vmul.f32 %v1126, %v1132
        %v1136 = vadd.f32 %v1114, %v1134
        %v1137 = vadd.f32 %v1115, %v1135
        %1138 = vrot.lane.b32.xlu0 %v970, 111
        %v1139 = vpop.permute.xlu0 %1138
        %1140 = vrot.lane.b32.xlu0 %v971, 111
        %v1141 = vpop.permute.xlu0 %1140
        %v1142 = vsel %vm791, %v1139, %v1141
        %v1146 = vsel %vm791, %v1141, %v1139
        %v1147 = vmul.f32 %v1142, %v803
        %v1148 = vmul.f32 %v1146, %v807
        %s1149 = scalar_lea.vmem %s7, 16
        %v1150 = vld [vmem:[%s1149] sm:$0x3]
        %1152 = vset.pattern.permute.xlu0 0
        %1153 = vperm.xlu0 %1152, %v1150
        %v1154 = vpop.permute.xlu0 %1153
        %v1156 = vmul.f32 %v1147, %v1154
        %v1157 = vmul.f32 %v1148, %v1154
        %v1158 = vadd.f32 %v1136, %v1156
        %v1159 = vadd.f32 %v1137, %v1157
        %s1160 = scalar_lea.vmem %s8, 4
        %v1161 = vld [vmem:[%s1160] sm:$0x3]
        %1163 = vset.pattern.permute.xlu0 0
        %1164 = vperm.xlu0 %1163, %v1161
        %v1165 = vpop.permute.xlu0 %1164
        %v1167 = vmul.f32 %v1158, %v1165
        %v1168 = vmul.f32 %v1159, %v1165
        %s1169 = scalar_lea.vmem %s8, 6
        %v1170 = vld [vmem:[%s1169] sm:$0x3]
        %1172 = vset.pattern.permute.xlu0 0
        %1173 = vperm.xlu0 %1172, %v1170
        %v1174 = vpop.permute.xlu0 %1173
        %v1176 = vadd.f32 %v1167, %v1174
        %v1177 = vadd.f32 %v1168, %v1174
        %v1178 = vmax.f32 %v1176, 0.0
        %v1179 = vmax.f32 %v1177, 0.0
        %v1182 = vrot.slane %v1178, 6
        %v1183 = vrot.slane %v1179, 6
        %vm1186 = vcmask 1041408
        %v1187 = vsel %vm1186, %v970, %v1182
        %v1188 = vsel %vm1186, %v971, %v1183
        %v1189 = vadd.f32 %v1187, %v838
        %v1190 = vadd.f32 %v1188, %v839
        %v1191 = vadd.f32 %v1189, %v372
        %v1192 = vadd.f32 %v1190, %v374
        %v1195 = vcombine.low %v1191, %v1192
        %1197 = vst [vmem:[%s366] sm:$0xff] %v1195
        %s1198 = sand.u32 %s248, 1
        %s1199 = scalar_lea.sflag [#allocation3], %s1198
        %s1200 = sand.u32 %s248, 1
        %s1201 = smul.addr %s1200, 8
        %s1202 = scalar_lea.vmem [#allocation5], %s1201
        // Predicated region
        $region65: #{tpu_custom_call.1} parent=59 // pred_check
          %p1203 = pneg %p258
        $region66: #{tpu_custom_call.1} parent=59 // pred_check_branch
          %1205 = sbr.rel (%p1203) target = $region68
        $region67: #{tpu_custom_call.1} parent=59 // pred_region
          %s1207 = ssub.s32 128, 128
          %1208 = vsyncadd %s1199, %s1207
          %s1209 = smul.addr %s25, 2
          %s1210 = smul.addr %s1209, 64
          %s1211 = scalar_lea.hbm %s10, %s1210
          %s1213 = sshll.u32 %s1202, 4
          %s1214 = int_to_ptr.vmem [resolvable:$true] %s1213
          %1216 = dma.vmem_to_hbm [thread:$0]  %s1214, 128, %s1211, %s1199
        $region68: #{tpu_custom_call.1} parent=59 // pred_fallthru
          _
      $region60: #{tpu_custom_call.1} parent=5 // pred_fallthru
        _
      %p1217 = scmp.le.s32.totalorder 2, %s20
      // Predicated region
      $region69: #{tpu_custom_call.1} parent=5 // pred_check
        %p1218 = pneg %p1217
      $region70: #{tpu_custom_call.1} parent=5 // pred_check_branch
        %1220 = sbr.rel (%p1218) target = $region72
      $region71: #{tpu_custom_call.1} parent=5 // pred_region
        %s1221 = ssub.s32 %s20, 2
        // Predicated region
        $region73: #{tpu_custom_call.1} parent=71 // pred_check
          %p1222 = pneg %p264
        $region74: #{tpu_custom_call.1} parent=71 // pred_check_branch
          %1224 = sbr.rel (%p1222) target = $region76
        $region75: #{tpu_custom_call.1} parent=71 // pred_region
          %s1225 = sand.u32 %s249, 1
          %s1226 = scalar_lea.sflag [#allocation3], %s1225
          %s1227 = sand.u32 %s249, 1
          %s1228 = smul.addr %s1227, 8
          %s1229 = scalar_lea.vmem [#allocation5], %s1228
          %1230 = dma.done %s1226, 128
        $region76: #{tpu_custom_call.1} parent=71 // pred_fallthru
          _
      $region72: #{tpu_custom_call.1} parent=5 // pred_fallthru
        _
    $region6: #{tpu_custom_call.1} parent=1 // loop_footer
      %s24 = sadd.s32 1, %s20
    $region7: #{tpu_custom_call.1} parent=1 // loop_footer_branch
      %19 = sbr.rel target = $region3
    $region8: #{tpu_custom_call.1} parent=1 // loop_exit
      _
    %1231 = vsyncpa [#allocation3], 1
    %s1232 = scalar_lea.sflag [#allocation3], 1
    %1233 = vsyncpa %s1232, 1
    %1234 = vsyncpa [#allocation4], 1
    %s1235 = scalar_lea.sflag [#allocation4], 1
    %1236 = vsyncpa %s1235, 1

</llo_original>
